<compile_context>
chip_gen: v7x
topology: tpu7x:2x2x1
jax: 0.10.0
libtpu: 0.0.40
codegen_flags: <defaults>
</compile_context>

<pallas_src>
import jax
import jax.numpy as jnp
from jax.experimental import pallas as pl
from jax.experimental.pallas import tpu as pltpu


# ---------------------------------------------------------------------------
# Helpers
# ---------------------------------------------------------------------------
def _round_up(x, m):
    return ((x + m - 1) // m) * m


def _tile_bytes(shape, dtype):
    """VMEM footprint of one buffer including (8,128) sublane/lane padding."""
    item = jnp.dtype(dtype).itemsize
    shape = tuple(int(d) for d in shape)
    if len(shape) == 0:
        return item
    if len(shape) == 1:
        return _round_up(shape[0], 128) * item
    lead = 1
    for d in shape[:-2]:
        lead *= d
    return lead * _round_up(shape[-2], 8) * _round_up(shape[-1], 128) * item


# ---------------------------------------------------------------------------
# Kernel
# ---------------------------------------------------------------------------
def _conv3x3_bn_relu(pad_ref, w_ref, scale_ref, shift_ref, Hout, Wout):
    """3x3 SAME conv over a zero-bordered (Hout+2, Wout+2, C) VMEM slab,
    fused with eval-mode BatchNorm + ReLU.  Returns (Hout*Wout, Cout) f32.

    C >= 128: unrolled 9-tap K=C accumulation (avoids materializing an im2col
    LHS ~9x the activation and the lane-axis concatenate relayout).
    C <  128: single im2col matmul (keeps the MXU K dimension reasonable)."""
    C = pad_ref.shape[-1]
    Cout = w_ref.shape[-1]

    if C >= 128:
        acc = jnp.zeros((Hout * Wout, Cout), jnp.float32)
        t = 0
        for dy in range(3):
            for dx in range(3):
                tap = pad_ref[dy:dy + Hout, dx:dx + Wout, :].reshape(Hout * Wout, C)
                acc = acc + jnp.dot(tap, w_ref[t * C:(t + 1) * C, :],
                                    preferred_element_type=jnp.float32)
                t += 1
    else:
        taps = [pad_ref[dy:dy + Hout, dx:dx + Wout, :]
                for dy in range(3) for dx in range(3)]
        lhs = jnp.concatenate(taps, axis=-1).reshape(Hout * Wout, 9 * C)
        acc = jnp.dot(lhs, w_ref[...], preferred_element_type=jnp.float32)

    return jnp.maximum(acc * scale_ref[...] + shift_ref[...], 0.0)


def _down_fused_kernel(x_ref, w1_ref, s1_ref, b1_ref, w2_ref, s2_ref, b2_ref,
                       o_ref, p1_ref, p2_ref):
    # x_ref:   (H, W, Cin)                one batch element, NHWC
    # w*_ref:  (9*Cin, Cmid)/(9*Cmid, Cout)  im2col/per-tap ordered conv weights
    # s*/b*:   (1, C) f32                 folded BN scale / (bias+BN) shift
    # o_ref:   (Hp*Wp, Cout)              flattened-spatial output (lane-padded)
    # p1_ref:  (Hp+2, Wp+2, Cin)   compute-dtype zero-bordered pooled slab
    # p2_ref:  (Hp+2, Wp+2, Cmid)  compute-dtype zero-bordered mid slab
    H, W, Cin = x_ref.shape
    Hp, Wp = H // 2, W // 2
    Cmid = w1_ref.shape[-1]
    cdt = p1_ref.dtype

    # ---- MaxPool2d(2): max of four two-axis strided reads (pure vreg VPU) ---
    x00 = x_ref[pl.ds(0, Hp, stride=2), pl.ds(0, Wp, stride=2), :]
    x01 = x_ref[pl.ds(0, Hp, stride=2), pl.ds(1, Wp, stride=2), :]
    x10 = x_ref[pl.ds(1, Hp, stride=2), pl.ds(0, Wp, stride=2), :]
    x11 = x_ref[pl.ds(1, Hp, stride=2), pl.ds(1, Wp, stride=2), :]
    pooled = jnp.maximum(jnp.maximum(x00, x01), jnp.maximum(x10, x11))

    # ---- SAME-padding halo slab 1: interior rows stored full width with the
    # zero halo columns concatenated in-register; only the top/bottom border
    # rows need an explicit zero write (redone every step so it stays correct
    # when the batch axis is sharded across TensorCores).
    zc1 = jnp.zeros((Hp, 1, Cin), cdt)
    p1_ref[1:Hp + 1, :, :] = jnp.concatenate([zc1, pooled.astype(cdt), zc1], axis=1)
    zr1 = jnp.zeros((1, Wp + 2, Cin), cdt)
    p1_ref[0:1, :, :] = zr1
    p1_ref[Hp + 1:Hp + 2, :, :] = zr1

    # ---- conv1 -> BN -> ReLU (stays in VMEM) --------------------------------
    y1 = _conv3x3_bn_relu(p1_ref, w1_ref, s1_ref, b1_ref, Hp, Wp)
    zc2 = jnp.zeros((Hp, 1, Cmid), cdt)
    p2_ref[1:Hp + 1, :, :] = jnp.concatenate(
        [zc2, y1.reshape(Hp, Wp, Cmid).astype(cdt), zc2], axis=1)
    zr2 = jnp.zeros((1, Wp + 2, Cmid), cdt)
    p2_ref[0:1, :, :] = zr2
    p2_ref[Hp + 1:Hp + 2, :, :] = zr2

    # ---- conv2 -> BN -> ReLU -> output --------------------------------------
    y2 = _conv3x3_bn_relu(p2_ref, w2_ref, s2_ref, b2_ref, Hp, Wp)
    o_ref[...] = y2.astype(o_ref.dtype)


# ---------------------------------------------------------------------------
# Parameter folding
# ---------------------------------------------------------------------------
def _fold_bn(w, b, gamma, beta, mean, var, cin_pad, cout_pad, compute_dtype,
             eps=1e-5):
    """Fold conv bias + eval-mode BatchNorm into per-channel (scale, shift),
    reorder OIHW weights into tap-major (9*cin_pad, cout_pad) layout, and
    zero-pad channels (padded outputs have scale=shift=0 -> ReLU gives 0;
    padded inputs have zero weight rows -> contribute nothing)."""
    scale = gamma / jnp.sqrt(var + eps)
    shift = (b - mean) * scale + beta
    cout, cin = w.shape[0], w.shape[1]
    w9 = jnp.transpose(w, (2, 3, 1, 0))                       # (3,3,cin,cout)
    w9 = jnp.pad(w9, ((0, 0), (0, 0), (0, cin_pad - cin), (0, cout_pad - cout)))
    w9 = w9.reshape(9 * cin_pad, cout_pad).astype(compute_dtype)
    scale = jnp.pad(scale, (0, cout_pad - cout))
    shift = jnp.pad(shift, (0, cout_pad - cout))
    return w9, scale[None, :].astype(jnp.float32), shift[None, :].astype(jnp.float32)


# ---------------------------------------------------------------------------
# Wrappers
# ---------------------------------------------------------------------------
def down_forward_nhwc(x, params, compute_dtype=jnp.bfloat16):
    """Down.forward on an NHWC activation (preferred between chained blocks:
    no NCHW<->NHWC HBM transpose passes).  NHWC in, NHWC out."""
    N, H, W, Cin = x.shape
    Hp, Wp = H // 2, W // 2

    (w1, b1, bn1), (w2, b2, bn2) = params
    Cmid, Cout = w1.shape[0], w2.shape[0]
    # Lane-pad channel counts to multiples of 128 so mid-slab / output stores
    # and the output DMA are lane-dense (no-op when already >= 128-aligned).
    Cmid_p = _round_up(Cmid, 128)
    Cout_p = _round_up(Cout, 128)

    w1r, s1, t1 = _fold_bn(w1, b1, *bn1, cin_pad=Cin, cout_pad=Cmid_p,
                           compute_dtype=compute_dtype)
    w2r, s2, t2 = _fold_bn(w2, b2, *bn2, cin_pad=Cmid_p, cout_pad=Cout_p,
                           compute_dtype=compute_dtype)

    # ---- VMEM budget: actual (8,128)-padded tile footprints + temporaries ---
    need = (
        2 * _tile_bytes((H, W, Cin), x.dtype)                    # dbl-buf input
        + 2 * _tile_bytes((Hp * Wp, Cout_p), x.dtype)            # dbl-buf output
        + 2 * (_tile_bytes((9 * Cin, Cmid_p), compute_dtype)     # weights (2x: safe)
               + _tile_bytes((9 * Cmid_p, Cout_p), compute_dtype)
               + 2 * _tile_bytes((1, Cmid_p), jnp.float32)
               + 2 * _tile_bytes((1, Cout_p), jnp.float32))
        + _tile_bytes((Hp + 2, Wp + 2, Cin), compute_dtype)      # p1 slab
        + _tile_bytes((Hp + 2, Wp + 2, Cmid_p), compute_dtype)   # p2 slab
        + max(_tile_bytes((Hp * Wp, 9 * Cin), compute_dtype) if Cin < 128 else 0,
              _tile_bytes((Hp * Wp, 9 * Cmid_p), compute_dtype) if Cmid_p < 128 else 0,
              _tile_bytes((Hp * Wp, Cin), compute_dtype))        # im2col/tap temp
        + _tile_bytes((Hp * Wp, Cmid_p), jnp.float32)            # conv1 f32 acc
        + _tile_bytes((Hp * Wp, Cout_p), jnp.float32)            # conv2 f32 acc
        + _tile_bytes((Hp, Wp, Cin), x.dtype)                    # pooled value
    )
    try:  # generation-aware cap: ~48 MiB on v7x (64 MiB VMEM), ~96 MiB on v5e/v6e
        cap = int(pltpu.get_tpu_info().vmem_capacity_bytes * 3 // 4)
    except Exception:
        cap = 48 * 1024 * 1024
    vmem_limit = int(min(max(need * 3 // 2, 32 * 1024 * 1024), cap))

    out = pl.pallas_call(
        _down_fused_kernel,
        out_shape=jax.ShapeDtypeStruct((N, Hp * Wp, Cout_p), x.dtype),
        grid=(N,),
        in_specs=[
            pl.BlockSpec((None, H, W, Cin), lambda n: (n, 0, 0, 0)),
            pl.BlockSpec((9 * Cin, Cmid_p), lambda n: (0, 0)),
            pl.BlockSpec((1, Cmid_p), lambda n: (0, 0)),
            pl.BlockSpec((1, Cmid_p), lambda n: (0, 0)),
            pl.BlockSpec((9 * Cmid_p, Cout_p), lambda n: (0, 0)),
            pl.BlockSpec((1, Cout_p), lambda n: (0, 0)),
            pl.BlockSpec((1, Cout_p), lambda n: (0, 0)),
        ],
        out_specs=pl.BlockSpec((None, Hp * Wp, Cout_p), lambda n: (n, 0, 0)),
        scratch_shapes=[
            pltpu.VMEM((Hp + 2, Wp + 2, Cin), compute_dtype),
            pltpu.VMEM((Hp + 2, Wp + 2, Cmid_p), compute_dtype),
        ],
        compiler_params=pltpu.CompilerParams(
            dimension_semantics=("parallel",),
            vmem_limit_bytes=vmem_limit),
    )(x, w1r, s1, t1, w2r, s2, t2)

    if Cout_p != Cout:
        out = out[..., :Cout]
    return out.reshape(N, Hp, Wp, Cout)


def down_forward(x_nchw, params, compute_dtype=jnp.bfloat16):
    """Down.forward with the PyTorch NCHW interface.  For chained Down blocks
    prefer `down_forward_nhwc` to avoid the layout-transpose HBM passes."""
    x = jnp.transpose(x_nchw, (0, 2, 3, 1))        # -> NHWC (C lane-minor)
    out = down_forward_nhwc(x, params, compute_dtype=compute_dtype)
    return jnp.transpose(out, (0, 3, 1, 2))        # -> NCHW


# ---------------------------------------------------------------------------
# Deterministic parameter init (shapes from Down(in_ch, out_ch).__init__)
# ---------------------------------------------------------------------------
def init_down_params(key, in_ch, out_ch, mid_ch=None):
    if mid_ch is None:
        mid_ch = out_ch

    def conv_init(k, cin, cout):
        bound = 1.0 / jnp.sqrt(cin * 9.0)
        kw, kb = jax.random.split(k)
        w = jax.random.uniform(kw, (cout, cin, 3, 3), jnp.float32, -bound, bound)
        b = jax.random.uniform(kb, (cout,), jnp.float32, -bound, bound)
        return w, b

    def bn_init(k, c):
        k1, k2, k3, k4 = jax.random.split(k, 4)
        gamma = jax.random.uniform(k1, (c,), jnp.float32, 0.5, 1.5)
        beta = jax.random.uniform(k2, (c,), jnp.float32, -0.5, 0.5)
        mean = jax.random.uniform(k3, (c,), jnp.float32, -0.5, 0.5)
        var = jax.random.uniform(k4, (c,), jnp.float32, 0.5, 1.5)
        return gamma, beta, mean, var

    k1, k2, k3, k4 = jax.random.split(key, 4)
    w1, b1 = conv_init(k1, in_ch, mid_ch)
    w2, b2 = conv_init(k2, mid_ch, out_ch)
    return ((w1, b1, bn_init(k3, mid_ch)),
            (w2, b2, bn_init(k4, out_ch)))


# ---------------------------------------------------------------------------
# Pure-JAX reference (for correctness check)
# ---------------------------------------------------------------------------
def _ref_down(x_nchw, params):
    x = jax.lax.reduce_window(x_nchw, -jnp.inf, jax.lax.max,
                              (1, 1, 2, 2), (1, 1, 2, 2), 'VALID')
    eps = 1e-5
    for (w, b, (gamma, beta, mean, var)) in params:
        x = jax.lax.conv_general_dilated(
            x, w, (1, 1), ((1, 1), (1, 1)),
            dimension_numbers=('NCHW', 'OIHW', 'NCHW'))
        x = x + b[None, :, None, None]
        x = (x - mean[None, :, None, None]) / jnp.sqrt(var[None, :, None, None] + eps)
        x = x * gamma[None, :, None, None] + beta[None, :, None, None]
        x = jnp.maximum(x, 0.0)
    return x


if __name__ == "__main__":
    key = jax.random.PRNGKey(0)
    kx, kp = jax.random.split(key)

    in_channels, out_channels = 4, 8
    x = jax.random.normal(kx, (2, in_channels, 16, 16), jnp.float32)
    params = init_down_params(kp, in_channels, out_channels)

    ref = _ref_down(x, params)

    # f32 MXU-operand path: should match the XLA reference tightly.
    out_f32 = jax.block_until_ready(down_forward(x, params, jnp.float32))
    assert out_f32.shape == (2, out_channels, 8, 8), out_f32.shape
    err32 = float(jnp.max(jnp.abs(out_f32 - ref)))
    assert err32 < 1e-4, err32

    # bf16 MXU-operand fast path (v6e/v7x): looser numerics expected.
    out_bf16 = jax.block_until_ready(down_forward(x, params, jnp.bfloat16))
    assert out_bf16.shape == (2, out_channels, 8, 8), out_bf16.shape
    errbf = float(jnp.max(jnp.abs(out_bf16 - ref)))
    assert errbf < 1e-1, errbf

    print("KERNEL_OK")
</pallas_src>

<mosaic_0001>
module attributes {stable_mosaic.version = 11 : i64} {
  func.func @_down_fused_kernel(%arg0: i32, %arg1: memref<1x16x16x4xf32, #tpu.memory_space<vmem>>, %arg2: memref<36x128xf32, #tpu.memory_space<vmem>>, %arg3: memref<1x128xf32, #tpu.memory_space<vmem>>, %arg4: memref<1x128xf32, #tpu.memory_space<vmem>>, %arg5: memref<1152x128xf32, #tpu.memory_space<vmem>>, %arg6: memref<1x128xf32, #tpu.memory_space<vmem>>, %arg7: memref<1x128xf32, #tpu.memory_space<vmem>>, %arg8: memref<1x64x128xf32, #tpu.memory_space<vmem>>, %arg9: memref<10x10x4xf32, #tpu.memory_space<vmem>>, %arg10: memref<10x10x128xf32, #tpu.memory_space<vmem>>) attributes {dimension_semantics = [#tpu.dimension_semantics<parallel>], iteration_bounds = array<i64: 2>, scalar_prefetch = 0 : i64, scratch_operands = 2 : i64, tpu.core_type = #tpu.core_type<tc>, window_params = [{transform_indices = @transform_0, window_bounds = array<i64: 1, 16, 16, 4>}, {pipeline_mode = #tpu.pipeline_mode<synchronous>, transform_indices = @transform_1, window_bounds = array<i64: 36, 128>}, {pipeline_mode = #tpu.pipeline_mode<synchronous>, transform_indices = @transform_2, window_bounds = array<i64: 1, 128>}, {pipeline_mode = #tpu.pipeline_mode<synchronous>, transform_indices = @transform_3, window_bounds = array<i64: 1, 128>}, {pipeline_mode = #tpu.pipeline_mode<synchronous>, transform_indices = @transform_4, window_bounds = array<i64: 1152, 128>}, {pipeline_mode = #tpu.pipeline_mode<synchronous>, transform_indices = @transform_5, window_bounds = array<i64: 1, 128>}, {pipeline_mode = #tpu.pipeline_mode<synchronous>, transform_indices = @transform_6, window_bounds = array<i64: 1, 128>}, {transform_indices = @transform_7, window_bounds = array<i64: 1, 64, 128>}]} {
    %c0 = arith.constant 0 : index
    %c0_0 = arith.constant 0 : index
    %c0_1 = arith.constant 0 : index
    %c0_2 = arith.constant 0 : index
    %0 = tpu.strided_load %arg1[%c0, %c0_0, %c0_1, %c0_2] {strides = array<i32: 1, 2, 2, 1>} : memref<1x16x16x4xf32, #tpu.memory_space<vmem>>, vector<1x8x8x4xf32>
    %1 = vector.shape_cast %0 : vector<1x8x8x4xf32> to vector<8x8x4xf32>
    %c0_3 = arith.constant 0 : index
    %c0_4 = arith.constant 0 : index
    %c1 = arith.constant 1 : index
    %c0_5 = arith.constant 0 : index
    %2 = tpu.strided_load %arg1[%c0_3, %c0_4, %c1, %c0_5] {strides = array<i32: 1, 2, 2, 1>} : memref<1x16x16x4xf32, #tpu.memory_space<vmem>>, vector<1x8x8x4xf32>
    %3 = vector.shape_cast %2 : vector<1x8x8x4xf32> to vector<8x8x4xf32>
    %c0_6 = arith.constant 0 : index
    %c1_7 = arith.constant 1 : index
    %c0_8 = arith.constant 0 : index
    %c0_9 = arith.constant 0 : index
    %4 = tpu.strided_load %arg1[%c0_6, %c1_7, %c0_8, %c0_9] {strides = array<i32: 1, 2, 2, 1>} : memref<1x16x16x4xf32, #tpu.memory_space<vmem>>, vector<1x8x8x4xf32>
    %5 = vector.shape_cast %4 : vector<1x8x8x4xf32> to vector<8x8x4xf32>
    %c0_10 = arith.constant 0 : index
    %c1_11 = arith.constant 1 : index
    %c1_12 = arith.constant 1 : index
    %c0_13 = arith.constant 0 : index
    %6 = tpu.strided_load %arg1[%c0_10, %c1_11, %c1_12, %c0_13] {strides = array<i32: 1, 2, 2, 1>} : memref<1x16x16x4xf32, #tpu.memory_space<vmem>>, vector<1x8x8x4xf32>
    %7 = vector.shape_cast %6 : vector<1x8x8x4xf32> to vector<8x8x4xf32>
    %8 = arith.maximumf %1, %3 : vector<8x8x4xf32>
    %9 = arith.maximumf %5, %7 : vector<8x8x4xf32>
    %10 = arith.maximumf %8, %9 : vector<8x8x4xf32>
    %cst = arith.constant 0.000000e+00 : f32
    %11 = vector.broadcast %cst : f32 to vector<8x1x4xf32>
    %12 = tpu.concatenate %11, %10, %11 in 1 : vector<8x1x4xf32>, vector<8x8x4xf32>, vector<8x1x4xf32> -> vector<8x10x4xf32>
    %c1_14 = arith.constant 1 : index
    %c0_15 = arith.constant 0 : index
    %c0_16 = arith.constant 0 : index
    %13 = vector.load %arg9[%c1_14, %c0_15, %c0_16] : memref<10x10x4xf32, #tpu.memory_space<vmem>>, vector<8x10x4xf32>
    tpu.vector_store %arg9[%c1_14, %c0_15, %c0_16], %12 {strides = array<i32>} : memref<10x10x4xf32, #tpu.memory_space<vmem>>, vector<8x10x4xf32>,
    %cst_17 = arith.constant 0.000000e+00 : f32
    %14 = vector.broadcast %cst_17 : f32 to vector<1x10x4xf32>
    %c0_18 = arith.constant 0 : index
    %c0_19 = arith.constant 0 : index
    %c0_20 = arith.constant 0 : index
    %15 = vector.load %arg9[%c0_18, %c0_19, %c0_20] : memref<10x10x4xf32, #tpu.memory_space<vmem>>, vector<1x10x4xf32>
    tpu.vector_store %arg9[%c0_18, %c0_19, %c0_20], %14 {strides = array<i32>} : memref<10x10x4xf32, #tpu.memory_space<vmem>>, vector<1x10x4xf32>,
    %c9 = arith.constant 9 : index
    %c0_21 = arith.constant 0 : index
    %c0_22 = arith.constant 0 : index
    %16 = vector.load %arg9[%c9, %c0_21, %c0_22] : memref<10x10x4xf32, #tpu.memory_space<vmem>>, vector<1x10x4xf32>
    tpu.vector_store %arg9[%c9, %c0_21, %c0_22], %14 {strides = array<i32>} : memref<10x10x4xf32, #tpu.memory_space<vmem>>, vector<1x10x4xf32>,
    %c0_23 = arith.constant 0 : index
    %c0_24 = arith.constant 0 : index
    %c0_25 = arith.constant 0 : index
    %17 = vector.load %arg9[%c0_23, %c0_24, %c0_25] : memref<10x10x4xf32, #tpu.memory_space<vmem>>, vector<8x8x4xf32>
    %c0_26 = arith.constant 0 : index
    %c1_27 = arith.constant 1 : index
    %c0_28 = arith.constant 0 : index
    %18 = vector.load %arg9[%c0_26, %c1_27, %c0_28] : memref<10x10x4xf32, #tpu.memory_space<vmem>>, vector<8x8x4xf32>
    %c0_29 = arith.constant 0 : index
    %c2 = arith.constant 2 : index
    %c0_30 = arith.constant 0 : index
    %19 = vector.load %arg9[%c0_29, %c2, %c0_30] : memref<10x10x4xf32, #tpu.memory_space<vmem>>, vector<8x8x4xf32>
    %c1_31 = arith.constant 1 : index
    %c0_32 = arith.constant 0 : index
    %c0_33 = arith.constant 0 : index
    %20 = vector.load %arg9[%c1_31, %c0_32, %c0_33] : memref<10x10x4xf32, #tpu.memory_space<vmem>>, vector<8x8x4xf32>
    %c1_34 = arith.constant 1 : index
    %c1_35 = arith.constant 1 : index
    %c0_36 = arith.constant 0 : index
    %21 = vector.load %arg9[%c1_34, %c1_35, %c0_36] : memref<10x10x4xf32, #tpu.memory_space<vmem>>, vector<8x8x4xf32>
    %c1_37 = arith.constant 1 : index
    %c2_38 = arith.constant 2 : index
    %c0_39 = arith.constant 0 : index
    %22 = vector.load %arg9[%c1_37, %c2_38, %c0_39] : memref<10x10x4xf32, #tpu.memory_space<vmem>>, vector<8x8x4xf32>
    %c2_40 = arith.constant 2 : index
    %c0_41 = arith.constant 0 : index
    %c0_42 = arith.constant 0 : index
    %23 = vector.load %arg9[%c2_40, %c0_41, %c0_42] : memref<10x10x4xf32, #tpu.memory_space<vmem>>, vector<8x8x4xf32>
    %c2_43 = arith.constant 2 : index
    %c1_44 = arith.constant 1 : index
    %c0_45 = arith.constant 0 : index
    %24 = vector.load %arg9[%c2_43, %c1_44, %c0_45] : memref<10x10x4xf32, #tpu.memory_space<vmem>>, vector<8x8x4xf32>
    %c2_46 = arith.constant 2 : index
    %c2_47 = arith.constant 2 : index
    %c0_48 = arith.constant 0 : index
    %25 = vector.load %arg9[%c2_46, %c2_47, %c0_48] : memref<10x10x4xf32, #tpu.memory_space<vmem>>, vector<8x8x4xf32>
    %26 = tpu.concatenate %17, %18, %19, %20, %21, %22, %23, %24, %25 in 2 : vector<8x8x4xf32>, vector<8x8x4xf32>, vector<8x8x4xf32>, vector<8x8x4xf32>, vector<8x8x4xf32>, vector<8x8x4xf32>, vector<8x8x4xf32>, vector<8x8x4xf32>, vector<8x8x4xf32> -> vector<8x8x36xf32>
    %27 = vector.shape_cast %26 : vector<8x8x36xf32> to vector<64x36xf32>
    %c0_49 = arith.constant 0 : index
    %c0_50 = arith.constant 0 : index
    %28 = vector.load %arg2[%c0_49, %c0_50] : memref<36x128xf32, #tpu.memory_space<vmem>>, vector<36x128xf32>
    %cst_51 = arith.constant dense<0.000000e+00> : vector<64x128xf32>
    %29 = tpu.matmul %27, %28, %cst_51 {dimension_numbers = #tpu.dot_dimension_numbers<[1], [0], [0], [1], [0, 0, 1, 1], [], []>} : vector<64x36xf32>, vector<36x128xf32>, vector<64x128xf32> -> vector<64x128xf32>
    %c0_52 = arith.constant 0 : index
    %c0_53 = arith.constant 0 : index
    %30 = vector.load %arg3[%c0_52, %c0_53] : memref<1x128xf32, #tpu.memory_space<vmem>>, vector<1x128xf32>
    %31 = vector.broadcast %30 : vector<1x128xf32> to vector<64x128xf32>
    %32 = arith.mulf %29, %31 : vector<64x128xf32>
    %c0_54 = arith.constant 0 : index
    %c0_55 = arith.constant 0 : index
    %33 = vector.load %arg4[%c0_54, %c0_55] : memref<1x128xf32, #tpu.memory_space<vmem>>, vector<1x128xf32>
    %34 = vector.broadcast %33 : vector<1x128xf32> to vector<64x128xf32>
    %35 = arith.addf %32, %34 : vector<64x128xf32>
    %cst_56 = arith.constant 0.000000e+00 : f32
    %36 = vector.broadcast %cst_56 : f32 to vector<64x128xf32>
    %37 = arith.maximumf %35, %36 : vector<64x128xf32>
    %cst_57 = arith.constant 0.000000e+00 : f32
    %38 = vector.broadcast %cst_57 : f32 to vector<8x1x128xf32>
    %39 = vector.shape_cast %37 : vector<64x128xf32> to vector<8x8x128xf32>
    %40 = tpu.concatenate %38, %39, %38 in 1 : vector<8x1x128xf32>, vector<8x8x128xf32>, vector<8x1x128xf32> -> vector<8x10x128xf32>
    %c1_58 = arith.constant 1 : index
    %c0_59 = arith.constant 0 : index
    %c0_60 = arith.constant 0 : index
    %41 = vector.load %arg10[%c1_58, %c0_59, %c0_60] : memref<10x10x128xf32, #tpu.memory_space<vmem>>, vector<8x10x128xf32>
    tpu.vector_store %arg10[%c1_58, %c0_59, %c0_60], %40 {strides = array<i32>} : memref<10x10x128xf32, #tpu.memory_space<vmem>>, vector<8x10x128xf32>,
    %cst_61 = arith.constant 0.000000e+00 : f32
    %42 = vector.broadcast %cst_61 : f32 to vector<1x10x128xf32>
    %c0_62 = arith.constant 0 : index
    %c0_63 = arith.constant 0 : index
    %c0_64 = arith.constant 0 : index
    %43 = vector.load %arg10[%c0_62, %c0_63, %c0_64] : memref<10x10x128xf32, #tpu.memory_space<vmem>>, vector<1x10x128xf32>
    tpu.vector_store %arg10[%c0_62, %c0_63, %c0_64], %42 {strides = array<i32>} : memref<10x10x128xf32, #tpu.memory_space<vmem>>, vector<1x10x128xf32>,
    %c9_65 = arith.constant 9 : index
    %c0_66 = arith.constant 0 : index
    %c0_67 = arith.constant 0 : index
    %44 = vector.load %arg10[%c9_65, %c0_66, %c0_67] : memref<10x10x128xf32, #tpu.memory_space<vmem>>, vector<1x10x128xf32>
    tpu.vector_store %arg10[%c9_65, %c0_66, %c0_67], %42 {strides = array<i32>} : memref<10x10x128xf32, #tpu.memory_space<vmem>>, vector<1x10x128xf32>,
    %cst_68 = arith.constant 0.000000e+00 : f32
    %45 = vector.broadcast %cst_68 : f32 to vector<64x128xf32>
    %c0_69 = arith.constant 0 : index
    %c0_70 = arith.constant 0 : index
    %c0_71 = arith.constant 0 : index
    %46 = vector.load %arg10[%c0_69, %c0_70, %c0_71] : memref<10x10x128xf32, #tpu.memory_space<vmem>>, vector<8x8x128xf32>
    %47 = vector.shape_cast %46 : vector<8x8x128xf32> to vector<64x128xf32>
    %c0_72 = arith.constant 0 : index
    %c0_73 = arith.constant 0 : index
    %48 = vector.load %arg5[%c0_72, %c0_73] : memref<1152x128xf32, #tpu.memory_space<vmem>>, vector<128x128xf32>
    %cst_74 = arith.constant dense<0.000000e+00> : vector<64x128xf32>
    %49 = tpu.matmul %47, %48, %cst_74 {dimension_numbers = #tpu.dot_dimension_numbers<[1], [0], [0], [1], [0, 0, 1, 1], [], []>} : vector<64x128xf32>, vector<128x128xf32>, vector<64x128xf32> -> vector<64x128xf32>
    %50 = arith.addf %45, %49 : vector<64x128xf32>
    %c0_75 = arith.constant 0 : index
    %c1_76 = arith.constant 1 : index
    %c0_77 = arith.constant 0 : index
    %51 = vector.load %arg10[%c0_75, %c1_76, %c0_77] : memref<10x10x128xf32, #tpu.memory_space<vmem>>, vector<8x8x128xf32>
    %52 = vector.shape_cast %51 : vector<8x8x128xf32> to vector<64x128xf32>
    %c128 = arith.constant 128 : index
    %c0_78 = arith.constant 0 : index
    %53 = vector.load %arg5[%c128, %c0_78] : memref<1152x128xf32, #tpu.memory_space<vmem>>, vector<128x128xf32>
    %cst_79 = arith.constant dense<0.000000e+00> : vector<64x128xf32>
    %54 = tpu.matmul %52, %53, %cst_79 {dimension_numbers = #tpu.dot_dimension_numbers<[1], [0], [0], [1], [0, 0, 1, 1], [], []>} : vector<64x128xf32>, vector<128x128xf32>, vector<64x128xf32> -> vector<64x128xf32>
    %55 = arith.addf %50, %54 : vector<64x128xf32>
    %c0_80 = arith.constant 0 : index
    %c2_81 = arith.constant 2 : index
    %c0_82 = arith.constant 0 : index
    %56 = vector.load %arg10[%c0_80, %c2_81, %c0_82] : memref<10x10x128xf32, #tpu.memory_space<vmem>>, vector<8x8x128xf32>
    %57 = vector.shape_cast %56 : vector<8x8x128xf32> to vector<64x128xf32>
    %c256 = arith.constant 256 : index
    %c0_83 = arith.constant 0 : index
    %58 = vector.load %arg5[%c256, %c0_83] : memref<1152x128xf32, #tpu.memory_space<vmem>>, vector<128x128xf32>
    %cst_84 = arith.constant dense<0.000000e+00> : vector<64x128xf32>
    %59 = tpu.matmul %57, %58, %cst_84 {dimension_numbers = #tpu.dot_dimension_numbers<[1], [0], [0], [1], [0, 0, 1, 1], [], []>} : vector<64x128xf32>, vector<128x128xf32>, vector<64x128xf32> -> vector<64x128xf32>
    %60 = arith.addf %55, %59 : vector<64x128xf32>
    %c1_85 = arith.constant 1 : index
    %c0_86 = arith.constant 0 : index
    %c0_87 = arith.constant 0 : index
    %61 = vector.load %arg10[%c1_85, %c0_86, %c0_87] : memref<10x10x128xf32, #tpu.memory_space<vmem>>, vector<8x8x128xf32>
    %62 = vector.shape_cast %61 : vector<8x8x128xf32> to vector<64x128xf32>
    %c384 = arith.constant 384 : index
    %c0_88 = arith.constant 0 : index
    %63 = vector.load %arg5[%c384, %c0_88] : memref<1152x128xf32, #tpu.memory_space<vmem>>, vector<128x128xf32>
    %cst_89 = arith.constant dense<0.000000e+00> : vector<64x128xf32>
    %64 = tpu.matmul %62, %63, %cst_89 {dimension_numbers = #tpu.dot_dimension_numbers<[1], [0], [0], [1], [0, 0, 1, 1], [], []>} : vector<64x128xf32>, vector<128x128xf32>, vector<64x128xf32> -> vector<64x128xf32>
    %65 = arith.addf %60, %64 : vector<64x128xf32>
    %c1_90 = arith.constant 1 : index
    %c1_91 = arith.constant 1 : index
    %c0_92 = arith.constant 0 : index
    %66 = vector.load %arg10[%c1_90, %c1_91, %c0_92] : memref<10x10x128xf32, #tpu.memory_space<vmem>>, vector<8x8x128xf32>
    %67 = vector.shape_cast %66 : vector<8x8x128xf32> to vector<64x128xf32>
    %c512 = arith.constant 512 : index
    %c0_93 = arith.constant 0 : index
    %68 = vector.load %arg5[%c512, %c0_93] : memref<1152x128xf32, #tpu.memory_space<vmem>>, vector<128x128xf32>
    %cst_94 = arith.constant dense<0.000000e+00> : vector<64x128xf32>
    %69 = tpu.matmul %67, %68, %cst_94 {dimension_numbers = #tpu.dot_dimension_numbers<[1], [0], [0], [1], [0, 0, 1, 1], [], []>} : vector<64x128xf32>, vector<128x128xf32>, vector<64x128xf32> -> vector<64x128xf32>
    %70 = arith.addf %65, %69 : vector<64x128xf32>
    %c1_95 = arith.constant 1 : index
    %c2_96 = arith.constant 2 : index
    %c0_97 = arith.constant 0 : index
    %71 = vector.load %arg10[%c1_95, %c2_96, %c0_97] : memref<10x10x128xf32, #tpu.memory_space<vmem>>, vector<8x8x128xf32>
    %72 = vector.shape_cast %71 : vector<8x8x128xf32> to vector<64x128xf32>
    %c640 = arith.constant 640 : index
    %c0_98 = arith.constant 0 : index
    %73 = vector.load %arg5[%c640, %c0_98] : memref<1152x128xf32, #tpu.memory_space<vmem>>, vector<128x128xf32>
    %cst_99 = arith.constant dense<0.000000e+00> : vector<64x128xf32>
    %74 = tpu.matmul %72, %73, %cst_99 {dimension_numbers = #tpu.dot_dimension_numbers<[1], [0], [0], [1], [0, 0, 1, 1], [], []>} : vector<64x128xf32>, vector<128x128xf32>, vector<64x128xf32> -> vector<64x128xf32>
    %75 = arith.addf %70, %74 : vector<64x128xf32>
    %c2_100 = arith.constant 2 : index
    %c0_101 = arith.constant 0 : index
    %c0_102 = arith.constant 0 : index
    %76 = vector.load %arg10[%c2_100, %c0_101, %c0_102] : memref<10x10x128xf32, #tpu.memory_space<vmem>>, vector<8x8x128xf32>
    %77 = vector.shape_cast %76 : vector<8x8x128xf32> to vector<64x128xf32>
    %c768 = arith.constant 768 : index
    %c0_103 = arith.constant 0 : index
    %78 = vector.load %arg5[%c768, %c0_103] : memref<1152x128xf32, #tpu.memory_space<vmem>>, vector<128x128xf32>
    %cst_104 = arith.constant dense<0.000000e+00> : vector<64x128xf32>
    %79 = tpu.matmul %77, %78, %cst_104 {dimension_numbers = #tpu.dot_dimension_numbers<[1], [0], [0], [1], [0, 0, 1, 1], [], []>} : vector<64x128xf32>, vector<128x128xf32>, vector<64x128xf32> -> vector<64x128xf32>
    %80 = arith.addf %75, %79 : vector<64x128xf32>
    %c2_105 = arith.constant 2 : index
    %c1_106 = arith.constant 1 : index
    %c0_107 = arith.constant 0 : index
    %81 = vector.load %arg10[%c2_105, %c1_106, %c0_107] : memref<10x10x128xf32, #tpu.memory_space<vmem>>, vector<8x8x128xf32>
    %82 = vector.shape_cast %81 : vector<8x8x128xf32> to vector<64x128xf32>
    %c896 = arith.constant 896 : index
    %c0_108 = arith.constant 0 : index
    %83 = vector.load %arg5[%c896, %c0_108] : memref<1152x128xf32, #tpu.memory_space<vmem>>, vector<128x128xf32>
    %cst_109 = arith.constant dense<0.000000e+00> : vector<64x128xf32>
    %84 = tpu.matmul %82, %83, %cst_109 {dimension_numbers = #tpu.dot_dimension_numbers<[1], [0], [0], [1], [0, 0, 1, 1], [], []>} : vector<64x128xf32>, vector<128x128xf32>, vector<64x128xf32> -> vector<64x128xf32>
    %85 = arith.addf %80, %84 : vector<64x128xf32>
    %c2_110 = arith.constant 2 : index
    %c2_111 = arith.constant 2 : index
    %c0_112 = arith.constant 0 : index
    %86 = vector.load %arg10[%c2_110, %c2_111, %c0_112] : memref<10x10x128xf32, #tpu.memory_space<vmem>>, vector<8x8x128xf32>
    %87 = vector.shape_cast %86 : vector<8x8x128xf32> to vector<64x128xf32>
    %c1024 = arith.constant 1024 : index
    %c0_113 = arith.constant 0 : index
    %88 = vector.load %arg5[%c1024, %c0_113] : memref<1152x128xf32, #tpu.memory_space<vmem>>, vector<128x128xf32>
    %cst_114 = arith.constant dense<0.000000e+00> : vector<64x128xf32>
    %89 = tpu.matmul %87, %88, %cst_114 {dimension_numbers = #tpu.dot_dimension_numbers<[1], [0], [0], [1], [0, 0, 1, 1], [], []>} : vector<64x128xf32>, vector<128x128xf32>, vector<64x128xf32> -> vector<64x128xf32>
    %90 = arith.addf %85, %89 : vector<64x128xf32>
    %c0_115 = arith.constant 0 : index
    %c0_116 = arith.constant 0 : index
    %91 = vector.load %arg6[%c0_115, %c0_116] : memref<1x128xf32, #tpu.memory_space<vmem>>, vector<1x128xf32>
    %92 = vector.broadcast %91 : vector<1x128xf32> to vector<64x128xf32>
    %93 = arith.mulf %90, %92 : vector<64x128xf32>
    %c0_117 = arith.constant 0 : index
    %c0_118 = arith.constant 0 : index
    %94 = vector.load %arg7[%c0_117, %c0_118] : memref<1x128xf32, #tpu.memory_space<vmem>>, vector<1x128xf32>
    %95 = vector.broadcast %94 : vector<1x128xf32> to vector<64x128xf32>
    %96 = arith.addf %93, %95 : vector<64x128xf32>
    %cst_119 = arith.constant 0.000000e+00 : f32
    %97 = vector.broadcast %cst_119 : f32 to vector<64x128xf32>
    %98 = arith.maximumf %96, %97 : vector<64x128xf32>
    %c0_120 = arith.constant 0 : index
    %c0_121 = arith.constant 0 : index
    %c0_122 = arith.constant 0 : index
    %99 = vector.load %arg8[%c0_120, %c0_121, %c0_122] : memref<1x64x128xf32, #tpu.memory_space<vmem>>, vector<1x64x128xf32>
    %100 = vector.shape_cast %99 : vector<1x64x128xf32> to vector<64x128xf32>
    %101 = vector.shape_cast %98 : vector<64x128xf32> to vector<1x64x128xf32>
    tpu.vector_store %arg8[%c0_120, %c0_121, %c0_122], %101 {strides = array<i32>} : memref<1x64x128xf32, #tpu.memory_space<vmem>>, vector<1x64x128xf32>,
    return
  }
  func.func @transform_0(%arg0: i32) -> (i32, i32, i32, i32) {
    %c0_i32 = arith.constant 0 : i32
    %c0_i32_0 = arith.constant 0 : i32
    %c0_i32_1 = arith.constant 0 : i32
    %c0_i32_2 = arith.constant 0 : i32
    return %arg0, %c0_i32, %c0_i32_0, %c0_i32_1 : i32, i32, i32, i32
  }
  func.func @transform_1(%arg0: i32) -> (i32, i32) {
    %c0_i32 = arith.constant 0 : i32
    %c0_i32_0 = arith.constant 0 : i32
    %c0_i32_1 = arith.constant 0 : i32
    return %c0_i32, %c0_i32_0 : i32, i32
  }
  func.func @transform_2(%arg0: i32) -> (i32, i32) {
    %c0_i32 = arith.constant 0 : i32
    %c0_i32_0 = arith.constant 0 : i32
    %c0_i32_1 = arith.constant 0 : i32
    return %c0_i32, %c0_i32_0 : i32, i32
  }
  func.func @transform_3(%arg0: i32) -> (i32, i32) {
    %c0_i32 = arith.constant 0 : i32
    %c0_i32_0 = arith.constant 0 : i32
    %c0_i32_1 = arith.constant 0 : i32
    return %c0_i32, %c0_i32_0 : i32, i32
  }
  func.func @transform_4(%arg0: i32) -> (i32, i32) {
    %c0_i32 = arith.constant 0 : i32
    %c0_i32_0 = arith.constant 0 : i32
    %c0_i32_1 = arith.constant 0 : i32
    return %c0_i32, %c0_i32_0 : i32, i32
  }
  func.func @transform_5(%arg0: i32) -> (i32, i32) {
    %c0_i32 = arith.constant 0 : i32
    %c0_i32_0 = arith.constant 0 : i32
    %c0_i32_1 = arith.constant 0 : i32
    return %c0_i32, %c0_i32_0 : i32, i32
  }
  func.func @transform_6(%arg0: i32) -> (i32, i32) {
    %c0_i32 = arith.constant 0 : i32
    %c0_i32_0 = arith.constant 0 : i32
    %c0_i32_1 = arith.constant 0 : i32
    return %c0_i32, %c0_i32_0 : i32, i32
  }
  func.func @transform_7(%arg0: i32) -> (i32, i32, i32) {
    %c0_i32 = arith.constant 0 : i32
    %c0_i32_0 = arith.constant 0 : i32
    %c0_i32_1 = arith.constant 0 : i32
    return %arg0, %c0_i32, %c0_i32_0 : i32, i32, i32
  }
}

</mosaic_0001>

<llo_original>
// kernel: tpu_custom_call.1
$region0: #{tpu_custom_call.1}
  #allocation0 [shape = 'u32[]', space=smem, size = 0x4, offset = 0x4, fixed_abs, tag = 'smem constant byte address 0x4 - core index']
  #allocation1 [shape = 'u32[144,128]{1,0:T(1,128)}', space=vmem, size = 0x12000, scoped, tag = 'internal scratch']
  #allocation2 [shape = 'f32[10,10,4]{2,1,0:T(8,128)}', space=vmem, size = 0x14000, scoped, tag = 'scratch operand']
  #allocation3 [shape = 'f32[10,10,128]{2,1,0:T(8,128)}', space=vmem, size = 0x14000, scoped, tag = 'scratch operand']
  %s0 = inlined_call_operand.vmem [shape: f32[2,16,16,4], index: 0, kind: input, shape index: {}]
  %s1 = inlined_call_operand.vmem [shape: f32[36,128], index: 1, kind: input, shape index: {}]
  %s2 = inlined_call_operand.vmem [shape: f32[1,128], index: 2, kind: input, shape index: {}]
  %s3 = inlined_call_operand.vmem [shape: f32[1,128], index: 3, kind: input, shape index: {}]
  %s4 = inlined_call_operand.hbm [shape: f32[1152,128], index: 4, kind: input, shape index: {}]
  %s5 = inlined_call_operand.vmem [shape: f32[1,128], index: 5, kind: input, shape index: {}]
  %s6 = inlined_call_operand.vmem [shape: f32[1,128], index: 6, kind: input, shape index: {}]
  %s7 = inlined_call_operand.hbm [shape: f32[2,64,128], index: 7, kind: output, shape index: {}]
  %s8 = sld [smem:[#allocation0]]
  $region65: #{tpu_custom_call.1} parent=0
    _
  %s10 = ssub.s32 1, %s8
  %s11 = scalar_select 0, %s10, %s8
  $region1: #{tpu_custom_call.1} parent=0
    #allocation4 [shape = 'u8[589824]{0}', space=vmem, size = 0x90000, scoped, tag = 'input window, operand 4, single buffered']
    #allocation5 [shape = 's32[2]{0}', space=sflag, size = 0x8, scoped, tag = 'scoped memory for tpu_custom_call.1']
    #allocation6 [shape = 's32[2]{0}', space=sflag, size = 0x8, scoped, tag = 'scoped memory for tpu_custom_call.1']
    #allocation7 [shape = 'u8[65536]{0}', space=vmem, size = 0x10000, scoped, tag = 'output window, operand 0']
    %12 = vsyncpa [#allocation5], 0
    %13 = vsyncpa [#allocation6], 0
    %s14 = scalar_lea.sflag [#allocation6], 1
    %15 = vsyncpa %s14, 0
    loop: start=0, step=1, limit=4
    $region2: #{tpu_custom_call.1} parent=1 // loop_pre_header
      _
    $region3: #{tpu_custom_call.1} parent=1 // loop_header
      %s17 = sphi 0, %s21
      %p18 = scmp.ge.s32.totalorder %s17, 4
      %s27 = sphi 0, %s29
      %s30 = sphi 0, %s27
      %s31 = sphi 0, %s30
      %s47 = sphi 0, %s31
      %s51 = sphi 0, %s51
      %s53 = sphi 0, %s51
      %s54 = sphi 0, %s53
      %s68 = sphi 0, %s54
      %s72 = sphi 0, %s72
      %s74 = sphi 0, %s72
      %s75 = sphi 0, %s74
      %s89 = sphi 0, %s75
      %s93 = sphi 0, %s93
      %s95 = sphi 0, %s93
      %s96 = sphi 0, %s95
      %s110 = sphi 0, %s96
      %s114 = sphi 0, %s114
      %s116 = sphi 0, %s114
      %s117 = sphi 0, %s116
      %s131 = sphi 0, %s117
      %s135 = sphi 0, %s135
      %s137 = sphi 0, %s135
      %s138 = sphi 0, %s137
      %s152 = sphi 0, %s138
      %s156 = sphi 0, %s156
      %s158 = sphi 0, %s156
      %s159 = sphi 0, %s158
      %s173 = sphi 0, %s159
      %s179 = sphi 0, %s181
      %s182 = sphi 0, %s179
      %s183 = sphi 0, %s182
      %s199 = sphi 0, %s183
    $region4: #{tpu_custom_call.1} parent=1 // loop_header_branch
      %20 = sbr.rel (%p18) target = $region8
    $region5: #{tpu_custom_call.1} parent=1 // loop_body
      %s22 = ssub.s32 %s17, 1
      %s23 = ssub.s32 %s17, 2
      %s24 = sadd.s32 %s17, 1
      %s25 = ssub.s32 %s17, %s24
      %p26 = scmp.eq.s32.totalorder %s25, 0
      %s28 = sadd.s32 %s27, 1
      %s29 = scalar_select %p26, %s27, %s28
      %p32 = pneg %p26
      %p33 = scmp.eq.s32.totalorder %s17, 1
      %p34 = por %p32, %p33
      %p35 = scmp.ne.s32.totalorder %s27, %s30
      %p36 = scmp.eq.s32.totalorder %s17, 0
      %p37 = por %p35, %p36
      %p38 = scmp.ne.s32.totalorder %s27, %s30
      %p39 = scmp.eq.s32.totalorder %s22, 1
      %p40 = por %p38, %p39
      %p41 = scmp.ne.s32.totalorder %s30, %s31
      %p42 = scmp.eq.s32.totalorder %s22, 0
      %p43 = por %p41, %p42
      %p44 = scmp.ne.s32.totalorder %s30, %s31
      %p45 = scmp.eq.s32.totalorder %s23, 1
      %p46 = por %p44, %p45
      %p48 = scmp.ne.s32.totalorder %s31, %s47
      %p49 = scmp.eq.s32.totalorder %s23, 0
      %p50 = por %p48, %p49
      %s52 = sadd.s32 %s51, 1
      %p55 = scmp.eq.s32.totalorder %s17, 1
      %p56 = scmp.ne.s32.totalorder %s51, %s53
      %p57 = scmp.eq.s32.totalorder %s17, 0
      %p58 = por %p56, %p57
      %p59 = scmp.ne.s32.totalorder %s51, %s53
      %p60 = scmp.eq.s32.totalorder %s22, 1
      %p61 = por %p59, %p60
      %p62 = scmp.ne.s32.totalorder %s53, %s54
      %p63 = scmp.eq.s32.totalorder %s22, 0
      %p64 = por %p62, %p63
      %p65 = scmp.ne.s32.totalorder %s53, %s54
      %p66 = scmp.eq.s32.totalorder %s23, 1
      %p67 = por %p65, %p66
      %p69 = scmp.ne.s32.totalorder %s54, %s68
      %p70 = scmp.eq.s32.totalorder %s23, 0
      %p71 = por %p69, %p70
      %s73 = sadd.s32 %s72, 1
      %p76 = scmp.eq.s32.totalorder %s17, 1
      %p77 = scmp.ne.s32.totalorder %s72, %s74
      %p78 = scmp.eq.s32.totalorder %s17, 0
      %p79 = por %p77, %p78
      %p80 = scmp.ne.s32.totalorder %s72, %s74
      %p81 = scmp.eq.s32.totalorder %s22, 1
      %p82 = por %p80, %p81
      %p83 = scmp.ne.s32.totalorder %s74, %s75
      %p84 = scmp.eq.s32.totalorder %s22, 0
      %p85 = por %p83, %p84
      %p86 = scmp.ne.s32.totalorder %s74, %s75
      %p87 = scmp.eq.s32.totalorder %s23, 1
      %p88 = por %p86, %p87
      %p90 = scmp.ne.s32.totalorder %s75, %s89
      %p91 = scmp.eq.s32.totalorder %s23, 0
      %p92 = por %p90, %p91
      %s94 = sadd.s32 %s93, 1
      %p97 = scmp.eq.s32.totalorder %s17, 1
      %p98 = scmp.ne.s32.totalorder %s93, %s95
      %p99 = scmp.eq.s32.totalorder %s17, 0
      %p100 = por %p98, %p99
      %p101 = scmp.ne.s32.totalorder %s93, %s95
      %p102 = scmp.eq.s32.totalorder %s22, 1
      %p103 = por %p101, %p102
      %p104 = scmp.ne.s32.totalorder %s95, %s96
      %p105 = scmp.eq.s32.totalorder %s22, 0
      %p106 = por %p104, %p105
      %p107 = scmp.ne.s32.totalorder %s95, %s96
      %p108 = scmp.eq.s32.totalorder %s23, 1
      %p109 = por %p107, %p108
      %p111 = scmp.ne.s32.totalorder %s96, %s110
      %p112 = scmp.eq.s32.totalorder %s23, 0
      %p113 = por %p111, %p112
      %s115 = sadd.s32 %s114, 1
      %p118 = scmp.eq.s32.totalorder %s17, 1
      %p119 = scmp.ne.s32.totalorder %s114, %s116
      %p120 = scmp.eq.s32.totalorder %s17, 0
      %p121 = por %p119, %p120
      %p122 = scmp.ne.s32.totalorder %s114, %s116
      %p123 = scmp.eq.s32.totalorder %s22, 1
      %p124 = por %p122, %p123
      %p125 = scmp.ne.s32.totalorder %s116, %s117
      %p126 = scmp.eq.s32.totalorder %s22, 0
      %p127 = por %p125, %p126
      %p128 = scmp.ne.s32.totalorder %s116, %s117
      %p129 = scmp.eq.s32.totalorder %s23, 1
      %p130 = por %p128, %p129
      %p132 = scmp.ne.s32.totalorder %s117, %s131
      %p133 = scmp.eq.s32.totalorder %s23, 0
      %p134 = por %p132, %p133
      %s136 = sadd.s32 %s135, 1
      %p139 = scmp.eq.s32.totalorder %s17, 1
      %p140 = scmp.ne.s32.totalorder %s135, %s137
      %p141 = scmp.eq.s32.totalorder %s17, 0
      %p142 = por %p140, %p141
      %p143 = scmp.ne.s32.totalorder %s135, %s137
      %p144 = scmp.eq.s32.totalorder %s22, 1
      %p145 = por %p143, %p144
      %p146 = scmp.ne.s32.totalorder %s137, %s138
      %p147 = scmp.eq.s32.totalorder %s22, 0
      %p148 = por %p146, %p147
      %p149 = scmp.ne.s32.totalorder %s137, %s138
      %p150 = scmp.eq.s32.totalorder %s23, 1
      %p151 = por %p149, %p150
      %p153 = scmp.ne.s32.totalorder %s138, %s152
      %p154 = scmp.eq.s32.totalorder %s23, 0
      %p155 = por %p153, %p154
      %s157 = sadd.s32 %s156, 1
      %p160 = scmp.eq.s32.totalorder %s17, 1
      %p161 = scmp.ne.s32.totalorder %s156, %s158
      %p162 = scmp.eq.s32.totalorder %s17, 0
      %p163 = por %p161, %p162
      %p164 = scmp.ne.s32.totalorder %s156, %s158
      %p165 = scmp.eq.s32.totalorder %s22, 1
      %p166 = por %p164, %p165
      %p167 = scmp.ne.s32.totalorder %s158, %s159
      %p168 = scmp.eq.s32.totalorder %s22, 0
      %p169 = por %p167, %p168
      %p170 = scmp.ne.s32.totalorder %s158, %s159
      %p171 = scmp.eq.s32.totalorder %s23, 1
      %p172 = por %p170, %p171
      %p174 = scmp.ne.s32.totalorder %s159, %s173
      %p175 = scmp.eq.s32.totalorder %s23, 0
      %p176 = por %p174, %p175
      %s177 = ssub.s32 %s17, %s24
      %p178 = scmp.eq.s32.totalorder %s177, 0
      %s180 = sadd.s32 %s179, 1
      %s181 = scalar_select %p178, %s179, %s180
      %p184 = pneg %p178
      %p185 = scmp.eq.s32.totalorder %s17, 1
      %p186 = por %p184, %p185
      %p187 = scmp.ne.s32.totalorder %s179, %s182
      %p188 = scmp.eq.s32.totalorder %s17, 0
      %p189 = por %p187, %p188
      %p190 = scmp.ne.s32.totalorder %s179, %s182
      %p191 = scmp.eq.s32.totalorder %s22, 1
      %p192 = por %p190, %p191
      %p193 = scmp.ne.s32.totalorder %s182, %s183
      %p194 = scmp.eq.s32.totalorder %s22, 0
      %p195 = por %p193, %p194
      %p196 = scmp.ne.s32.totalorder %s182, %s183
      %p197 = scmp.eq.s32.totalorder %s23, 1
      %p198 = por %p196, %p197
      %p200 = scmp.ne.s32.totalorder %s183, %s199
      %p201 = scmp.eq.s32.totalorder %s23, 0
      %p202 = por %p200, %p201
      %p203 = scmp.le.s32.totalorder 1, %s17
      %p204 = scmp.lt.s32.totalorder %s17, 3
      %p205 = pnand %p203, %p204
      %p206 = pneg %p205
      // Predicated region
      $region9: #{tpu_custom_call.1} parent=5 // pred_check
        _
      $region10: #{tpu_custom_call.1} parent=5 // pred_check_branch
        %208 = sbr.rel (%p205) target = $region12
      $region11: #{tpu_custom_call.1} parent=5 // pred_region
        %s209 = ssub.s32 %s17, 1
        // Predicated region
        $region13: #{tpu_custom_call.1} parent=11 // pred_check
          %p210 = pneg %p64
        $region14: #{tpu_custom_call.1} parent=11 // pred_check_branch
          %212 = sbr.rel (%p210) target = $region16
        $region15: #{tpu_custom_call.1} parent=11 // pred_region
          _
        $region16: #{tpu_custom_call.1} parent=11 // pred_fallthru
          _
        // Predicated region
        $region17: #{tpu_custom_call.1} parent=11 // pred_check
          %p213 = pneg %p85
        $region18: #{tpu_custom_call.1} parent=11 // pred_check_branch
          %215 = sbr.rel (%p213) target = $region20
        $region19: #{tpu_custom_call.1} parent=11 // pred_region
          _
        $region20: #{tpu_custom_call.1} parent=11 // pred_fallthru
          _
        // Predicated region
        $region21: #{tpu_custom_call.1} parent=11 // pred_check
          %p216 = pneg %p106
        $region22: #{tpu_custom_call.1} parent=11 // pred_check_branch
          %218 = sbr.rel (%p216) target = $region24
        $region23: #{tpu_custom_call.1} parent=11 // pred_region
          _
        $region24: #{tpu_custom_call.1} parent=11 // pred_fallthru
          _
        // Predicated region
        $region25: #{tpu_custom_call.1} parent=11 // pred_check
          %p219 = pneg %p127
        $region26: #{tpu_custom_call.1} parent=11 // pred_check_branch
          %221 = sbr.rel (%p219) target = $region28
        $region27: #{tpu_custom_call.1} parent=11 // pred_region
          %s223 = ssub.s32 18432, 18432
          %224 = vsyncadd [#allocation5], %s223
          %s225 = sshll.u32 [#allocation4], 4
          %s226 = int_to_ptr.vmem [resolvable:$true] %s225
          %231 = dma.hbm_to_vmem [thread:$0]  %s4, 18432, %s226, [#allocation5], 128, 128, 8
        $region28: #{tpu_custom_call.1} parent=11 // pred_fallthru
          _
        // Predicated region
        $region29: #{tpu_custom_call.1} parent=11 // pred_check
          %p232 = pneg %p148
        $region30: #{tpu_custom_call.1} parent=11 // pred_check_branch
          %234 = sbr.rel (%p232) target = $region32
        $region31: #{tpu_custom_call.1} parent=11 // pred_region
          _
        $region32: #{tpu_custom_call.1} parent=11 // pred_fallthru
          _
        // Predicated region
        $region33: #{tpu_custom_call.1} parent=11 // pred_check
          %p235 = pneg %p169
        $region34: #{tpu_custom_call.1} parent=11 // pred_check_branch
          %237 = sbr.rel (%p235) target = $region36
        $region35: #{tpu_custom_call.1} parent=11 // pred_region
          _
        $region36: #{tpu_custom_call.1} parent=11 // pred_fallthru
          _
      $region12: #{tpu_custom_call.1} parent=5 // pred_fallthru
        _
      %p238 = scmp.lt.s32.totalorder %s17, 2
      // Predicated region
      $region37: #{tpu_custom_call.1} parent=5 // pred_check
        %p239 = pneg %p238
      $region38: #{tpu_custom_call.1} parent=5 // pred_check_branch
        %241 = sbr.rel (%p239) target = $region40
      $region39: #{tpu_custom_call.1} parent=5 // pred_region
        // Predicated region
        $region41: #{tpu_custom_call.1} parent=39 // pred_check
          %p242 = pneg %p37
        $region42: #{tpu_custom_call.1} parent=39 // pred_check_branch
          %244 = sbr.rel (%p242) target = $region44
        $region43: #{tpu_custom_call.1} parent=39 // pred_region
          %p245 = scmp.lt.s32.totalorder %s17, 1
          %s246 = scalar_select %p245, %s17, 1
          %s247 = smul.addr %s246, 32
          %s248 = smul.addr %s247, 8
          %s249 = scalar_lea.vmem %s0, %s248
        $region44: #{tpu_custom_call.1} parent=39 // pred_fallthru
          _
      $region40: #{tpu_custom_call.1} parent=5 // pred_fallthru
        _
      %p250 = scmp.le.s32.totalorder 1, %s17
      %p251 = scmp.lt.s32.totalorder %s17, 3
      %p252 = pnand %p250, %p251
      %p253 = pneg %p252
      // Predicated region
      $region45: #{tpu_custom_call.1} parent=5 // pred_check
        _
      $region46: #{tpu_custom_call.1} parent=5 // pred_check_branch
        %255 = sbr.rel (%p252) target = $region48
      $region47: #{tpu_custom_call.1} parent=5 // pred_region
        %s256 = ssub.s32 %s17, 1
        // Predicated region
        $region49: #{tpu_custom_call.1} parent=47 // pred_check
          %p257 = pneg %p127
        $region50: #{tpu_custom_call.1} parent=47 // pred_check_branch
          %259 = sbr.rel (%p257) target = $region52
        $region51: #{tpu_custom_call.1} parent=47 // pred_region
          %260 = dma.done [#allocation5], 18432
        $region52: #{tpu_custom_call.1} parent=47 // pred_fallthru
          _
        %p261 = scmp.lt.s32.totalorder %s22, 1
        %s262 = scalar_select %p261, %s22, 1
        %s263 = smul.addr %s262, 32
        %s264 = smul.addr %s263, 8
        %s265 = scalar_lea.vmem %s0, %s264
        %p266 = pneg %p43
        %p267 = pneg %p40
        %p268 = pneg %p64
        %p269 = pneg %p61
        %p270 = pneg %p85
        %p271 = pneg %p82
        %p272 = pneg %p106
        %p273 = pneg %p103
        %p274 = pneg %p127
        %p275 = pneg %p124
        %p276 = pneg %p148
        %p277 = pneg %p145
        %p278 = pneg %p169
        %p279 = pneg %p166
        %p280 = pneg %p195
        %p281 = pneg %p192
        %s282 = sand.u32 %s182, 1
        %s283 = scalar_lea.sflag [#allocation6], %s282
        %s284 = sand.u32 %s182, 1
        %s285 = smul.addr %s284, 64
        %s286 = scalar_lea.vmem [#allocation7], %s285
        %p287 = scmp.lt.s32.totalorder %s22, 1
        %s288 = scalar_select %p287, %s22, 1
        %s289 = smul.addr %s288, 32
        %s290 = smul.addr %s289, 8
        %s291 = scalar_lea.vmem %s0, %s290
        %v292 = vld [vmem:[%s291] ss:$2 sm:$0xff]
        %s293 = scalar_lea.vmem %s291, 32
        %v294 = vld [vmem:[%s293] ss:$2 sm:$0xff]
        %s295 = scalar_lea.vmem %s291, 64
        %v296 = vld [vmem:[%s295] ss:$2 sm:$0xff]
        %s297 = scalar_lea.vmem %s291, 96
        %v298 = vld [vmem:[%s297] ss:$2 sm:$0xff]
        %s299 = scalar_lea.vmem %s291, 128
        %v300 = vld [vmem:[%s299] ss:$2 sm:$0xff]
        %s301 = scalar_lea.vmem %s291, 160
        %v302 = vld [vmem:[%s301] ss:$2 sm:$0xff]
        %s303 = scalar_lea.vmem %s291, 192
        %v304 = vld [vmem:[%s303] ss:$2 sm:$0xff]
        %s305 = scalar_lea.vmem %s291, 224
        %v306 = vld [vmem:[%s305] ss:$2 sm:$0xff]
        %s307 = scalar_lea.vmem %s291, 1
        %v308 = vld [vmem:[%s307] ss:$2 sm:$0xff]
        %s309 = scalar_lea.vmem %s291, 33
        %v310 = vld [vmem:[%s309] ss:$2 sm:$0xff]
        %s311 = scalar_lea.vmem %s291, 65
        %v312 = vld [vmem:[%s311] ss:$2 sm:$0xff]
        %s313 = scalar_lea.vmem %s291, 97
        %v314 = vld [vmem:[%s313] ss:$2 sm:$0xff]
        %s315 = scalar_lea.vmem %s291, 129
        %v316 = vld [vmem:[%s315] ss:$2 sm:$0xff]
        %s317 = scalar_lea.vmem %s291, 161
        %v318 = vld [vmem:[%s317] ss:$2 sm:$0xff]
        %s319 = scalar_lea.vmem %s291, 193
        %v320 = vld [vmem:[%s319] ss:$2 sm:$0xff]
        %s321 = scalar_lea.vmem %s291, 225
        %v322 = vld [vmem:[%s321] ss:$2 sm:$0xff]
        %s323 = scalar_lea.vmem %s291, 16
        %v324 = vld [vmem:[%s323] ss:$2 sm:$0xff]
        %s325 = scalar_lea.vmem %s323, 32
        %v326 = vld [vmem:[%s325] ss:$2 sm:$0xff]
        %s327 = scalar_lea.vmem %s323, 64
        %v328 = vld [vmem:[%s327] ss:$2 sm:$0xff]
        %s329 = scalar_lea.vmem %s323, 96
        %v330 = vld [vmem:[%s329] ss:$2 sm:$0xff]
        %s331 = scalar_lea.vmem %s323, 128
        %v332 = vld [vmem:[%s331] ss:$2 sm:$0xff]
        %s333 = scalar_lea.vmem %s323, 160
        %v334 = vld [vmem:[%s333] ss:$2 sm:$0xff]
        %s335 = scalar_lea.vmem %s323, 192
        %v336 = vld [vmem:[%s335] ss:$2 sm:$0xff]
        %s337 = scalar_lea.vmem %s323, 224
        %v338 = vld [vmem:[%s337] ss:$2 sm:$0xff]
        %s339 = scalar_lea.vmem %s323, 1
        %v340 = vld [vmem:[%s339] ss:$2 sm:$0xff]
        %s341 = scalar_lea.vmem %s323, 33
        %v342 = vld [vmem:[%s341] ss:$2 sm:$0xff]
        %s343 = scalar_lea.vmem %s323, 65
        %v344 = vld [vmem:[%s343] ss:$2 sm:$0xff]
        %s345 = scalar_lea.vmem %s323, 97
        %v346 = vld [vmem:[%s345] ss:$2 sm:$0xff]
        %s347 = scalar_lea.vmem %s323, 129
        %v348 = vld [vmem:[%s347] ss:$2 sm:$0xff]
        %s349 = scalar_lea.vmem %s323, 161
        %v350 = vld [vmem:[%s349] ss:$2 sm:$0xff]
        %s351 = scalar_lea.vmem %s323, 193
        %v352 = vld [vmem:[%s351] ss:$2 sm:$0xff]
        %s353 = scalar_lea.vmem %s323, 225
        %v354 = vld [vmem:[%s353] ss:$2 sm:$0xff]
        %v355 = vmax.f32 %v292, %v308
        %v356 = vmax.f32 %v294, %v310
        %v357 = vmax.f32 %v296, %v312
        %v358 = vmax.f32 %v298, %v314
        %v359 = vmax.f32 %v300, %v316
        %v360 = vmax.f32 %v302, %v318
        %v361 = vmax.f32 %v304, %v320
        %v362 = vmax.f32 %v306, %v322
        %v363 = vmax.f32 %v324, %v340
        %v364 = vmax.f32 %v326, %v342
        %v365 = vmax.f32 %v328, %v344
        %v366 = vmax.f32 %v330, %v346
        %v367 = vmax.f32 %v332, %v348
        %v368 = vmax.f32 %v334, %v350
        %v369 = vmax.f32 %v336, %v352
        %v370 = vmax.f32 %v338, %v354
        %v371 = vmax.f32 %v355, %v363
        %v372 = vmax.f32 %v356, %v364
        %v373 = vmax.f32 %v357, %v365
        %v374 = vmax.f32 %v358, %v366
        %v375 = vmax.f32 %v359, %v367
        %v376 = vmax.f32 %v360, %v368
        %v377 = vmax.f32 %v361, %v369
        %v378 = vmax.f32 %v362, %v370
        %v387 = vrot.slane %v371, 7
        %v388 = vrot.slane %v372, 7
        %v389 = vrot.slane %v373, 7
        %v390 = vrot.slane %v374, 7
        %v391 = vrot.slane %v375, 7
        %v392 = vrot.slane %v376, 7
        %v393 = vrot.slane %v377, 7
        %v394 = vrot.slane %v378, 7
        %vm403 = vcmask 1040384
        %v404 = vsel %vm403, 0.0, %v387
        %v405 = vsel %vm403, 0.0, %v388
        %v406 = vsel %vm403, 0.0, %v389
        %v407 = vsel %vm403, 0.0, %v390
        %v408 = vsel %vm403, 0.0, %v391
        %v409 = vsel %vm403, 0.0, %v392
        %v410 = vsel %vm403, 0.0, %v393
        %v411 = vsel %vm403, 0.0, %v394
        %v412 = vsel %vm403, %v387, 0.0
        %v413 = vsel %vm403, %v388, 0.0
        %v414 = vsel %vm403, %v389, 0.0
        %v415 = vsel %vm403, %v390, 0.0
        %v416 = vsel %vm403, %v391, 0.0
        %v417 = vsel %vm403, %v392, 0.0
        %v418 = vsel %vm403, %v393, 0.0
        %v419 = vsel %vm403, %v394, 0.0
        %s420 = scalar_lea.vmem [#allocation2], 16
        %vm421 = vcmask 31744
        %422 = vst.msk [vmem:[%s420] sm:$0xff] %vm421, %v404
        %vm423 = vcmask 25600
        %424 = vst.msk [vmem:[%s420 + $0x8] sm:$0x3] %vm423, %v412
        %425 = vst.msk [vmem:[%s420 + $0x10] sm:$0xff] %vm421, %v405
        %426 = vst.msk [vmem:[%s420 + $0x18] sm:$0x3] %vm423, %v413
        %427 = vst.msk [vmem:[%s420 + $0x20] sm:$0xff] %vm421, %v406
        %428 = vst.msk [vmem:[%s420 + $0x28] sm:$0x3] %vm423, %v414
        %429 = vst.msk [vmem:[%s420 + $0x30] sm:$0xff] %vm421, %v407
        %430 = vst.msk [vmem:[%s420 + $0x38] sm:$0x3] %vm423, %v415
        %431 = vst.msk [vmem:[%s420 + $0x40] sm:$0xff] %vm421, %v408
        %432 = vst.msk [vmem:[%s420 + $0x48] sm:$0x3] %vm423, %v416
        %433 = vst.msk [vmem:[%s420 + $0x50] sm:$0xff] %vm421, %v409
        %434 = vst.msk [vmem:[%s420 + $0x58] sm:$0x3] %vm423, %v417
        %435 = vst.msk [vmem:[%s420 + $0x60] sm:$0xff] %vm421, %v410
        %436 = vst.msk [vmem:[%s420 + $0x68] sm:$0x3] %vm423, %v418
        %437 = vst.msk [vmem:[%s420 + $0x70] sm:$0xff] %vm421, %v411
        %438 = vst.msk [vmem:[%s420 + $0x78] sm:$0x3] %vm423, %v419
        %439 = vst.msk [vmem:[#allocation2] sm:$0xff] %vm421, 0.0
        %440 = vst.msk [vmem:[#allocation2 + $0x8] sm:$0x3] %vm423, 0.0
        %s441 = scalar_lea.vmem [#allocation2], 144
        %442 = vst.msk [vmem:[%s441] sm:$0xff] %vm421, 0.0
        %443 = vst.msk [vmem:[%s441 + $0x8] sm:$0x3] %vm423, 0.0
        %v444 = vld [vmem:[#allocation2] sm:$0xff]
        %v445 = vld [vmem:[#allocation2 + $0x10] sm:$0xff]
        %v446 = vld [vmem:[#allocation2 + $0x20] sm:$0xff]
        %v447 = vld [vmem:[#allocation2 + $0x30] sm:$0xff]
        %v448 = vld [vmem:[#allocation2 + $0x40] sm:$0xff]
        %v449 = vld [vmem:[#allocation2 + $0x50] sm:$0xff]
        %v450 = vld [vmem:[#allocation2 + $0x60] sm:$0xff]
        %v451 = vld [vmem:[#allocation2 + $0x70] sm:$0xff]
        %v452 = vld [vmem:[#allocation2 + $0x1] sm:$0xff]
        %v453 = vld [vmem:[#allocation2 + $0x11] sm:$0xff]
        %v454 = vld [vmem:[#allocation2 + $0x21] sm:$0xff]
        %v455 = vld [vmem:[#allocation2 + $0x31] sm:$0xff]
        %v456 = vld [vmem:[#allocation2 + $0x41] sm:$0xff]
        %v457 = vld [vmem:[#allocation2 + $0x51] sm:$0xff]
        %v458 = vld [vmem:[#allocation2 + $0x61] sm:$0xff]
        %v459 = vld [vmem:[#allocation2 + $0x71] sm:$0xff]
        %v460 = vld [vmem:[#allocation2 + $0x2] sm:$0xff]
        %v461 = vld [vmem:[#allocation2 + $0x12] sm:$0xff]
        %v462 = vld [vmem:[#allocation2 + $0x22] sm:$0xff]
        %v463 = vld [vmem:[#allocation2 + $0x32] sm:$0xff]
        %v464 = vld [vmem:[#allocation2 + $0x42] sm:$0xff]
        %v465 = vld [vmem:[#allocation2 + $0x52] sm:$0xff]
        %v466 = vld [vmem:[#allocation2 + $0x62] sm:$0xff]
        %v467 = vld [vmem:[#allocation2 + $0x72] sm:$0xff]
        %v468 = vld [vmem:[%s420] sm:$0xff]
        %v469 = vld [vmem:[%s420 + $0x10] sm:$0xff]
        %v470 = vld [vmem:[%s420 + $0x20] sm:$0xff]
        %v471 = vld [vmem:[%s420 + $0x30] sm:$0xff]
        %v472 = vld [vmem:[%s420 + $0x40] sm:$0xff]
        %v473 = vld [vmem:[%s420 + $0x50] sm:$0xff]
        %v474 = vld [vmem:[%s420 + $0x60] sm:$0xff]
        %v475 = vld [vmem:[%s420 + $0x70] sm:$0xff]
        %v476 = vld [vmem:[%s420 + $0x1] sm:$0xff]
        %v477 = vld [vmem:[%s420 + $0x11] sm:$0xff]
        %v478 = vld [vmem:[%s420 + $0x21] sm:$0xff]
        %v479 = vld [vmem:[%s420 + $0x31] sm:$0xff]
        %v480 = vld [vmem:[%s420 + $0x41] sm:$0xff]
        %v481 = vld [vmem:[%s420 + $0x51] sm:$0xff]
        %v482 = vld [vmem:[%s420 + $0x61] sm:$0xff]
        %v483 = vld [vmem:[%s420 + $0x71] sm:$0xff]
        %v484 = vld [vmem:[%s420 + $0x2] sm:$0xff]
        %v485 = vld [vmem:[%s420 + $0x12] sm:$0xff]
        %v486 = vld [vmem:[%s420 + $0x22] sm:$0xff]
        %v487 = vld [vmem:[%s420 + $0x32] sm:$0xff]
        %v488 = vld [vmem:[%s420 + $0x42] sm:$0xff]
        %v489 = vld [vmem:[%s420 + $0x52] sm:$0xff]
        %v490 = vld [vmem:[%s420 + $0x62] sm:$0xff]
        %v491 = vld [vmem:[%s420 + $0x72] sm:$0xff]
        %s492 = scalar_lea.vmem [#allocation2], 32
        %v493 = vld [vmem:[%s492] sm:$0xff]
        %v494 = vld [vmem:[%s492 + $0x10] sm:$0xff]
        %v495 = vld [vmem:[%s492 + $0x20] sm:$0xff]
        %v496 = vld [vmem:[%s492 + $0x30] sm:$0xff]
        %v497 = vld [vmem:[%s492 + $0x40] sm:$0xff]
        %v498 = vld [vmem:[%s492 + $0x50] sm:$0xff]
        %v499 = vld [vmem:[%s492 + $0x60] sm:$0xff]
        %v500 = vld [vmem:[%s492 + $0x70] sm:$0xff]
        %v501 = vld [vmem:[%s492 + $0x1] sm:$0xff]
        %v502 = vld [vmem:[%s492 + $0x11] sm:$0xff]
        %v503 = vld [vmem:[%s492 + $0x21] sm:$0xff]
        %v504 = vld [vmem:[%s492 + $0x31] sm:$0xff]
        %v505 = vld [vmem:[%s492 + $0x41] sm:$0xff]
        %v506 = vld [vmem:[%s492 + $0x51] sm:$0xff]
        %v507 = vld [vmem:[%s492 + $0x61] sm:$0xff]
        %v508 = vld [vmem:[%s492 + $0x71] sm:$0xff]
        %v509 = vld [vmem:[%s492 + $0x2] sm:$0xff]
        %v510 = vld [vmem:[%s492 + $0x12] sm:$0xff]
        %v511 = vld [vmem:[%s492 + $0x22] sm:$0xff]
        %v512 = vld [vmem:[%s492 + $0x32] sm:$0xff]
        %v513 = vld [vmem:[%s492 + $0x42] sm:$0xff]
        %v514 = vld [vmem:[%s492 + $0x52] sm:$0xff]
        %v515 = vld [vmem:[%s492 + $0x62] sm:$0xff]
        %v516 = vld [vmem:[%s492 + $0x72] sm:$0xff]
        %525 = vrot.lane.b32.xlu0 %v452, 4
        %v526 = vpop.permute.xlu0 %525
        %527 = vrot.lane.b32.xlu0 %v453, 4
        %v528 = vpop.permute.xlu0 %527
        %529 = vrot.lane.b32.xlu0 %v454, 4
        %v530 = vpop.permute.xlu0 %529
        %531 = vrot.lane.b32.xlu0 %v455, 4
        %v532 = vpop.permute.xlu0 %531
        %533 = vrot.lane.b32.xlu0 %v456, 4
        %v534 = vpop.permute.xlu0 %533
        %535 = vrot.lane.b32.xlu0 %v457, 4
        %v536 = vpop.permute.xlu0 %535
        %537 = vrot.lane.b32.xlu0 %v458, 4
        %v538 = vpop.permute.xlu0 %537
        %539 = vrot.lane.b32.xlu0 %v459, 4
        %v540 = vpop.permute.xlu0 %539
        %557 = vrot.lane.b32.xlu0 %v460, 8
        %v558 = vpop.permute.xlu0 %557
        %559 = vrot.lane.b32.xlu0 %v461, 8
        %v560 = vpop.permute.xlu0 %559
        %561 = vrot.lane.b32.xlu0 %v462, 8
        %v562 = vpop.permute.xlu0 %561
        %563 = vrot.lane.b32.xlu0 %v463, 8
        %v564 = vpop.permute.xlu0 %563
        %565 = vrot.lane.b32.xlu0 %v464, 8
        %v566 = vpop.permute.xlu0 %565
        %567 = vrot.lane.b32.xlu0 %v465, 8
        %v568 = vpop.permute.xlu0 %567
        %569 = vrot.lane.b32.xlu0 %v466, 8
        %v570 = vpop.permute.xlu0 %569
        %571 = vrot.lane.b32.xlu0 %v467, 8
        %v572 = vpop.permute.xlu0 %571
        %589 = vrot.lane.b32.xlu0 %v468, 12
        %v590 = vpop.permute.xlu0 %589
        %591 = vrot.lane.b32.xlu0 %v469, 12
        %v592 = vpop.permute.xlu0 %591
        %593 = vrot.lane.b32.xlu0 %v470, 12
        %v594 = vpop.permute.xlu0 %593
        %595 = vrot.lane.b32.xlu0 %v471, 12
        %v596 = vpop.permute.xlu0 %595
        %597 = vrot.lane.b32.xlu0 %v472, 12
        %v598 = vpop.permute.xlu0 %597
        %599 = vrot.lane.b32.xlu0 %v473, 12
        %v600 = vpop.permute.xlu0 %599
        %601 = vrot.lane.b32.xlu0 %v474, 12
        %v602 = vpop.permute.xlu0 %601
        %603 = vrot.lane.b32.xlu0 %v475, 12
        %v604 = vpop.permute.xlu0 %603
        %621 = vrot.lane.b32.xlu0 %v476, 16
        %v622 = vpop.permute.xlu0 %621
        %623 = vrot.lane.b32.xlu0 %v477, 16
        %v624 = vpop.permute.xlu0 %623
        %625 = vrot.lane.b32.xlu0 %v478, 16
        %v626 = vpop.permute.xlu0 %625
        %627 = vrot.lane.b32.xlu0 %v479, 16
        %v628 = vpop.permute.xlu0 %627
        %629 = vrot.lane.b32.xlu0 %v480, 16
        %v630 = vpop.permute.xlu0 %629
        %631 = vrot.lane.b32.xlu0 %v481, 16
        %v632 = vpop.permute.xlu0 %631
        %633 = vrot.lane.b32.xlu0 %v482, 16
        %v634 = vpop.permute.xlu0 %633
        %635 = vrot.lane.b32.xlu0 %v483, 16
        %v636 = vpop.permute.xlu0 %635
        %653 = vrot.lane.b32.xlu0 %v484, 20
        %v654 = vpop.permute.xlu0 %653
        %655 = vrot.lane.b32.xlu0 %v485, 20
        %v656 = vpop.permute.xlu0 %655
        %657 = vrot.lane.b32.xlu0 %v486, 20
        %v658 = vpop.permute.xlu0 %657
        %659 = vrot.lane.b32.xlu0 %v487, 20
        %v660 = vpop.permute.xlu0 %659
        %661 = vrot.lane.b32.xlu0 %v488, 20
        %v662 = vpop.permute.xlu0 %661
        %663 = vrot.lane.b32.xlu0 %v489, 20
        %v664 = vpop.permute.xlu0 %663
        %665 = vrot.lane.b32.xlu0 %v490, 20
        %v666 = vpop.permute.xlu0 %665
        %667 = vrot.lane.b32.xlu0 %v491, 20
        %v668 = vpop.permute.xlu0 %667
        %685 = vrot.lane.b32.xlu0 %v493, 24
        %v686 = vpop.permute.xlu0 %685
        %687 = vrot.lane.b32.xlu0 %v494, 24
        %v688 = vpop.permute.xlu0 %687
        %689 = vrot.lane.b32.xlu0 %v495, 24
        %v690 = vpop.permute.xlu0 %689
        %691 = vrot.lane.b32.xlu0 %v496, 24
        %v692 = vpop.permute.xlu0 %691
        %693 = vrot.lane.b32.xlu0 %v497, 24
        %v694 = vpop.permute.xlu0 %693
        %695 = vrot.lane.b32.xlu0 %v498, 24
        %v696 = vpop.permute.xlu0 %695
        %697 = vrot.lane.b32.xlu0 %v499, 24
        %v698 = vpop.permute.xlu0 %697
        %699 = vrot.lane.b32.xlu0 %v500, 24
        %v700 = vpop.permute.xlu0 %699
        %717 = vrot.lane.b32.xlu0 %v501, 28
        %v718 = vpop.permute.xlu0 %717
        %719 = vrot.lane.b32.xlu0 %v502, 28
        %v720 = vpop.permute.xlu0 %719
        %721 = vrot.lane.b32.xlu0 %v503, 28
        %v722 = vpop.permute.xlu0 %721
        %723 = vrot.lane.b32.xlu0 %v504, 28
        %v724 = vpop.permute.xlu0 %723
        %725 = vrot.lane.b32.xlu0 %v505, 28
        %v726 = vpop.permute.xlu0 %725
        %727 = vrot.lane.b32.xlu0 %v506, 28
        %v728 = vpop.permute.xlu0 %727
        %729 = vrot.lane.b32.xlu0 %v507, 28
        %v730 = vpop.permute.xlu0 %729
        %731 = vrot.lane.b32.xlu0 %v508, 28
        %v732 = vpop.permute.xlu0 %731
        %749 = vrot.lane.b32.xlu0 %v509, 32
        %v750 = vpop.permute.xlu0 %749
        %751 = vrot.lane.b32.xlu0 %v510, 32
        %v752 = vpop.permute.xlu0 %751
        %753 = vrot.lane.b32.xlu0 %v511, 32
        %v754 = vpop.permute.xlu0 %753
        %755 = vrot.lane.b32.xlu0 %v512, 32
        %v756 = vpop.permute.xlu0 %755
        %757 = vrot.lane.b32.xlu0 %v513, 32
        %v758 = vpop.permute.xlu0 %757
        %759 = vrot.lane.b32.xlu0 %v514, 32
        %v760 = vpop.permute.xlu0 %759
        %761 = vrot.lane.b32.xlu0 %v515, 32
        %v762 = vpop.permute.xlu0 %761
        %763 = vrot.lane.b32.xlu0 %v516, 32
        %v764 = vpop.permute.xlu0 %763
        %v773 = vsel %vm421, %v444, %v526
        %v774 = vsel %vm421, %v445, %v528
        %v775 = vsel %vm421, %v446, %v530
        %v776 = vsel %vm421, %v447, %v532
        %v777 = vsel %vm421, %v448, %v534
        %v778 = vsel %vm421, %v449, %v536
        %v779 = vsel %vm421, %v450, %v538
        %v780 = vsel %vm421, %v451, %v540
        %vm781 = vcmask 64512
        %v782 = vsel %vm781, %v773, %v558
        %v783 = vsel %vm781, %v774, %v560
        %v784 = vsel %vm781, %v775, %v562
        %v785 = vsel %vm781, %v776, %v564
        %v786 = vsel %vm781, %v777, %v566
        %v787 = vsel %vm781, %v778, %v568
        %v788 = vsel %vm781, %v779, %v570
        %v789 = vsel %vm781, %v780, %v572
        %vm790 = vcmask 97280
        %v791 = vsel %vm790, %v782, %v590
        %v792 = vsel %vm790, %v783, %v592
        %v793 = vsel %vm790, %v784, %v594
        %v794 = vsel %vm790, %v785, %v596
        %v795 = vsel %vm790, %v786, %v598
        %v796 = vsel %vm790, %v787, %v600
        %v797 = vsel %vm790, %v788, %v602
        %v798 = vsel %vm790, %v789, %v604
        %vm799 = vcmask 130048
        %v800 = vsel %vm799, %v791, %v622
        %v801 = vsel %vm799, %v792, %v624
        %v802 = vsel %vm799, %v793, %v626
        %v803 = vsel %vm799, %v794, %v628
        %v804 = vsel %vm799, %v795, %v630
        %v805 = vsel %vm799, %v796, %v632
        %v806 = vsel %vm799, %v797, %v634
        %v807 = vsel %vm799, %v798, %v636
        %vm808 = vcmask 162816
        %v809 = vsel %vm808, %v800, %v654
        %v810 = vsel %vm808, %v801, %v656
        %v811 = vsel %vm808, %v802, %v658
        %v812 = vsel %vm808, %v803, %v660
        %v813 = vsel %vm808, %v804, %v662
        %v814 = vsel %vm808, %v805, %v664
        %v815 = vsel %vm808, %v806, %v666
        %v816 = vsel %vm808, %v807, %v668
        %vm817 = vcmask 195584
        %v818 = vsel %vm817, %v809, %v686
        %v819 = vsel %vm817, %v810, %v688
        %v820 = vsel %vm817, %v811, %v690
        %v821 = vsel %vm817, %v812, %v692
        %v822 = vsel %vm817, %v813, %v694
        %v823 = vsel %vm817, %v814, %v696
        %v824 = vsel %vm817, %v815, %v698
        %v825 = vsel %vm817, %v816, %v700
        %vm826 = vcmask 228352
        %v827 = vsel %vm826, %v818, %v718
        %v828 = vsel %vm826, %v819, %v720
        %v829 = vsel %vm826, %v820, %v722
        %v830 = vsel %vm826, %v821, %v724
        %v831 = vsel %vm826, %v822, %v726
        %v832 = vsel %vm826, %v823, %v728
        %v833 = vsel %vm826, %v824, %v730
        %v834 = vsel %vm826, %v825, %v732
        %vm835 = vcmask 261120
        %v836 = vsel %vm835, %v827, %v750
        %v837 = vsel %vm835, %v828, %v752
        %v838 = vsel %vm835, %v829, %v754
        %v839 = vsel %vm835, %v830, %v756
        %v840 = vsel %vm835, %v831, %v758
        %v841 = vsel %vm835, %v832, %v760
        %v842 = vsel %vm835, %v833, %v762
        %v843 = vsel %vm835, %v834, %v764
        %v844 = vld [vmem:[%s1] sm:$0xff]
        %v845 = vld [vmem:[%s1 + $0x8] sm:$0xff]
        %v846 = vld [vmem:[%s1 + $0x10] sm:$0xff]
        %v847 = vld [vmem:[%s1 + $0x18] sm:$0xff]
        %v848 = vld [vmem:[%s1 + $0x20] sm:$0xf]
        %vm849 = vcmask 293888
        %v851 = vsel %vm849, %v836, 0
        %v854 = vsel %vm849, %v837, 0
        %v857 = vsel %vm849, %v838, 0
        %v860 = vsel %vm849, %v839, 0
        %v863 = vsel %vm849, %v840, 0
        %v866 = vsel %vm849, %v841, 0
        %v869 = vsel %vm849, %v842, 0
        %v872 = vsel %vm849, %v843, 0
        %vm874 = vcmask 1043456
        %v876 = vsel %vm874, %v848, 0
        %878 = vmatprep.subr.mxu0 0.0
        %879 = vmatpush1.msra.mxu0 %v844
        %880 = vmatprep.subr.mxu0 0.0
        %881 = vmatpush1.msra.mxu0 %v845
        %882 = vmatprep.subr.mxu0 0.0
        %883 = vmatpush1.msra.mxu0 %v846
        %884 = vmatprep.subr.mxu0 0.0
        %885 = vmatpush1.msra.mxu0 %v847
        %886 = vmatprep.subr.mxu0 0.0
        %887 = vmatpush1.msra.mxu0 %v876
        %888 = vmatprep.subr.mxu0 0.0
        %889 = vmatpush1.msra.mxu0 0.0
        %890 = vmatprep.subr.mxu0 0.0
        %891 = vmatpush1.msra.mxu0 0.0
        %892 = vmatprep.subr.mxu0 0.0
        %893 = vmatpush1.msra.mxu0 0.0
        %894 = vmatprep.subr.mxu0 0.0
        %895 = vmatpush1.msra.mxu0 0.0
        %896 = vmatprep.subr.mxu0 0.0
        %897 = vmatpush1.msra.mxu0 0.0
        %898 = vmatprep.subr.mxu0 0.0
        %899 = vmatpush1.msra.mxu0 0.0
        %900 = vmatprep.subr.mxu0 0.0
        %901 = vmatpush1.msra.mxu0 0.0
        %902 = vmatprep.subr.mxu0 0.0
        %903 = vmatpush1.msra.mxu0 0.0
        %904 = vmatprep.subr.mxu0 0.0
        %905 = vmatpush1.msra.mxu0 0.0
        %906 = vmatprep.subr.mxu0 0.0
        %907 = vmatpush1.msra.mxu0 0.0
        %908 = vmatprep.subr.mxu0 0.0
        %909 = vmatpush1.msra.mxu0 0.0
        %910 = vmatprep.subr.mxu0 0.0
        %911 = vmatpush1.msra.mxu0 0.0
        %912 = vmatprep.subr.mxu0 0.0
        %913 = vmatpush1.msra.mxu0 0.0
        %914 = vmatprep.subr.mxu0 0.0
        %915 = vmatpush1.msra.mxu0 0.0
        %916 = vmatprep.subr.mxu0 0.0
        %917 = vmatpush1.msra.mxu0 0.0
        %918 = vmatprep.subr.mxu0 0.0
        %919 = vmatpush1.msra.mxu0 0.0
        %920 = vmatprep.subr.mxu0 0.0
        %921 = vmatpush1.msra.mxu0 0.0
        %922 = vmatprep.subr.mxu0 0.0
        %923 = vmatpush1.msra.mxu0 0.0
        %924 = vmatprep.subr.mxu0 0.0
        %925 = vmatpush1.msra.mxu0 0.0
        %926 = vmatprep.subr.mxu0 0.0
        %927 = vmatpush1.msra.mxu0 0.0
        %928 = vmatprep.subr.mxu0 0.0
        %929 = vmatpush1.msra.mxu0 0.0
        %930 = vmatprep.subr.mxu0 0.0
        %931 = vmatpush1.msra.mxu0 0.0
        %932 = vmatprep.subr.mxu0 0.0
        %933 = vmatpush1.msra.mxu0 0.0
        %934 = vmatprep.subr.mxu0 0.0
        %935 = vmatpush1.msra.mxu0 0.0
        %936 = vmatprep.subr.mxu0 0.0
        %937 = vmatpush1.msra.mxu0 0.0
        %938 = vmatprep.subr.mxu0 0.0
        %939 = vmatpush1.msra.mxu0 0.0
        %940 = vmatprep.subr.mxu0 0.0
        %941 = vmatpush1.msra.mxu0 0.0
        %942 = vmatprep.mubr.f32.mxu0 0.0
        %943 = vmatmul.mubr.f32.gmra.mrb[0].mxu0 %v851
        %v944 = vpop.f32.mrb[0].mxu0
        %v945 = vadd.f32 0.0, %v944
        %v946 = vpop.f32.mrb[0].mxu0
        %947 = vmatprep.mubr.f32.mxu0 0.0
        %948 = vmatmul.mubr.f32.gmra.mrb[0].mxu0 %v854
        %v949 = vpop.f32.mrb[0].mxu0
        %v950 = vadd.f32 0.0, %v949
        %v951 = vpop.f32.mrb[0].mxu0
        %952 = vmatprep.mubr.f32.mxu0 0.0
        %953 = vmatmul.mubr.f32.gmra.mrb[0].mxu0 %v857
        %v954 = vpop.f32.mrb[0].mxu0
        %v955 = vadd.f32 0.0, %v954
        %v956 = vpop.f32.mrb[0].mxu0
        %957 = vmatprep.mubr.f32.mxu0 0.0
        %958 = vmatmul.mubr.f32.gmra.mrb[0].mxu0 %v860
        %v959 = vpop.f32.mrb[0].mxu0
        %v960 = vadd.f32 0.0, %v959
        %v961 = vpop.f32.mrb[0].mxu0
        %962 = vmatprep.mubr.f32.mxu0 0.0
        %963 = vmatmul.mubr.f32.gmra.mrb[0].mxu0 %v863
        %v964 = vpop.f32.mrb[0].mxu0
        %v965 = vadd.f32 0.0, %v964
        %v966 = vpop.f32.mrb[0].mxu0
        %967 = vmatprep.mubr.f32.mxu0 0.0
        %968 = vmatmul.mubr.f32.gmra.mrb[0].mxu0 %v866
        %v969 = vpop.f32.mrb[0].mxu0
        %v970 = vadd.f32 0.0, %v969
        %v971 = vpop.f32.mrb[0].mxu0
        %972 = vmatprep.mubr.f32.mxu0 0.0
        %973 = vmatmul.mubr.f32.gmra.mrb[0].mxu0 %v869
        %v974 = vpop.f32.mrb[0].mxu0
        %v975 = vadd.f32 0.0, %v974
        %v976 = vpop.f32.mrb[0].mxu0
        %977 = vmatprep.mubr.f32.mxu0 0.0
        %978 = vmatmul.mubr.f32.gmra.mrb[0].mxu0 %v872
        %v979 = vpop.f32.mrb[0].mxu0
        %v980 = vadd.f32 0.0, %v979
        %v981 = vpop.f32.mrb[0].mxu0
        %982 = vdwg.mxu0
        %v983 = vld [vmem:[%s2] sm:$0x1]
        %v985 = vlaneseq
        %v986 = vshrl.u32 %v985, 7
        %v987 = vsub.s32 0, %v986
        %v988 = vrot.slane %v983, %v987
        %v990 = vmul.f32 %v945, %v988
        %v991 = vmul.f32 %v950, %v988
        %v992 = vmul.f32 %v955, %v988
        %v993 = vmul.f32 %v960, %v988
        %v994 = vmul.f32 %v965, %v988
        %v995 = vmul.f32 %v970, %v988
        %v996 = vmul.f32 %v975, %v988
        %v997 = vmul.f32 %v980, %v988
        %v998 = vld [vmem:[%s3] sm:$0x1]
        %v1000 = vlaneseq
        %v1001 = vshrl.u32 %v1000, 7
        %v1002 = vsub.s32 0, %v1001
        %v1003 = vrot.slane %v998, %v1002
        %v1005 = vadd.f32 %v990, %v1003
        %v1006 = vadd.f32 %v991, %v1003
        %v1007 = vadd.f32 %v992, %v1003
        %v1008 = vadd.f32 %v993, %v1003
        %v1009 = vadd.f32 %v994, %v1003
        %v1010 = vadd.f32 %v995, %v1003
        %v1011 = vadd.f32 %v996, %v1003
        %v1012 = vadd.f32 %v997, %v1003
        %v1013 = vmax.f32 %v1005, 0.0
        %v1014 = vmax.f32 %v1006, 0.0
        %v1015 = vmax.f32 %v1007, 0.0
        %v1016 = vmax.f32 %v1008, 0.0
        %v1017 = vmax.f32 %v1009, 0.0
        %v1018 = vmax.f32 %v1010, 0.0
        %v1019 = vmax.f32 %v1011, 0.0
        %v1020 = vmax.f32 %v1012, 0.0
        %v1029 = vrot.slane %v1013, 7
        %v1030 = vrot.slane %v1014, 7
        %v1031 = vrot.slane %v1015, 7
        %v1032 = vrot.slane %v1016, 7
        %v1033 = vrot.slane %v1017, 7
        %v1034 = vrot.slane %v1018, 7
        %v1035 = vrot.slane %v1019, 7
        %v1036 = vrot.slane %v1020, 7
        %v1045 = vsel %vm403, 0.0, %v1029
        %v1046 = vsel %vm403, 0.0, %v1030
        %v1047 = vsel %vm403, 0.0, %v1031
        %v1048 = vsel %vm403, 0.0, %v1032
        %v1049 = vsel %vm403, 0.0, %v1033
        %v1050 = vsel %vm403, 0.0, %v1034
        %v1051 = vsel %vm403, 0.0, %v1035
        %v1052 = vsel %vm403, 0.0, %v1036
        %v1053 = vsel %vm403, %v1029, 0.0
        %v1054 = vsel %vm403, %v1030, 0.0
        %v1055 = vsel %vm403, %v1031, 0.0
        %v1056 = vsel %vm403, %v1032, 0.0
        %v1057 = vsel %vm403, %v1033, 0.0
        %v1058 = vsel %vm403, %v1034, 0.0
        %v1059 = vsel %vm403, %v1035, 0.0
        %v1060 = vsel %vm403, %v1036, 0.0
        %s1061 = scalar_lea.vmem [#allocation3], 16
        %1062 = vst [vmem:[%s1061] sm:$0xff] %v1045
        %1063 = vst [vmem:[%s1061 + $0x8] sm:$0x3] %v1053
        %1064 = vst [vmem:[%s1061 + $0x10] sm:$0xff] %v1046
        %1065 = vst [vmem:[%s1061 + $0x18] sm:$0x3] %v1054
        %1066 = vst [vmem:[%s1061 + $0x20] sm:$0xff] %v1047
        %1067 = vst [vmem:[%s1061 + $0x28] sm:$0x3] %v1055
        %1068 = vst [vmem:[%s1061 + $0x30] sm:$0xff] %v1048
        %1069 = vst [vmem:[%s1061 + $0x38] sm:$0x3] %v1056
        %1070 = vst [vmem:[%s1061 + $0x40] sm:$0xff] %v1049
        %1071 = vst [vmem:[%s1061 + $0x48] sm:$0x3] %v1057
        %1072 = vst [vmem:[%s1061 + $0x50] sm:$0xff] %v1050
        %1073 = vst [vmem:[%s1061 + $0x58] sm:$0x3] %v1058
        %1074 = vst [vmem:[%s1061 + $0x60] sm:$0xff] %v1051
        %1075 = vst [vmem:[%s1061 + $0x68] sm:$0x3] %v1059
        %1076 = vst [vmem:[%s1061 + $0x70] sm:$0xff] %v1052
        %1077 = vst [vmem:[%s1061 + $0x78] sm:$0x3] %v1060
        %1078 = vst [vmem:[#allocation3] sm:$0xff] 0.0
        %1079 = vst [vmem:[#allocation3 + $0x8] sm:$0x3] 0.0
        %s1080 = scalar_lea.vmem [#allocation3], 144
        %1081 = vst [vmem:[%s1080] sm:$0xff] 0.0
        %1082 = vst [vmem:[%s1080 + $0x8] sm:$0x3] 0.0
        %v1083 = vld [vmem:[#allocation3] sm:$0xff]
        %v1084 = vld [vmem:[#allocation3 + $0x10] sm:$0xff]
        %v1085 = vld [vmem:[#allocation3 + $0x20] sm:$0xff]
        %v1086 = vld [vmem:[#allocation3 + $0x30] sm:$0xff]
        %v1087 = vld [vmem:[#allocation3 + $0x40] sm:$0xff]
        %v1088 = vld [vmem:[#allocation3 + $0x50] sm:$0xff]
        %v1089 = vld [vmem:[#allocation3 + $0x60] sm:$0xff]
        %v1090 = vld [vmem:[#allocation3 + $0x70] sm:$0xff]
        %v1091 = vld [vmem:[#allocation4] sm:$0xff]
        %v1092 = vld [vmem:[#allocation4 + $0x8] sm:$0xff]
        %v1093 = vld [vmem:[#allocation4 + $0x10] sm:$0xff]
        %v1094 = vld [vmem:[#allocation4 + $0x18] sm:$0xff]
        %v1095 = vld [vmem:[#allocation4 + $0x20] sm:$0xff]
        %v1096 = vld [vmem:[#allocation4 + $0x28] sm:$0xff]
        %v1097 = vld [vmem:[#allocation4 + $0x30] sm:$0xff]
        %v1098 = vld [vmem:[#allocation4 + $0x38] sm:$0xff]
        %v1099 = vld [vmem:[#allocation4 + $0x40] sm:$0xff]
        %v1100 = vld [vmem:[#allocation4 + $0x48] sm:$0xff]
        %v1101 = vld [vmem:[#allocation4 + $0x50] sm:$0xff]
        %v1102 = vld [vmem:[#allocation4 + $0x58] sm:$0xff]
        %v1103 = vld [vmem:[#allocation4 + $0x60] sm:$0xff]
        %v1104 = vld [vmem:[#allocation4 + $0x68] sm:$0xff]
        %v1105 = vld [vmem:[#allocation4 + $0x70] sm:$0xff]
        %v1106 = vld [vmem:[#allocation4 + $0x78] sm:$0xff]
        %v1107 = vld [vmem:[#allocation3 + $0x1] sm:$0xff]
        %v1108 = vld [vmem:[#allocation3 + $0x11] sm:$0xff]
        %v1109 = vld [vmem:[#allocation3 + $0x21] sm:$0xff]
        %v1110 = vld [vmem:[#allocation3 + $0x31] sm:$0xff]
        %v1111 = vld [vmem:[#allocation3 + $0x41] sm:$0xff]
        %v1112 = vld [vmem:[#allocation3 + $0x51] sm:$0xff]
        %v1113 = vld [vmem:[#allocation3 + $0x61] sm:$0xff]
        %v1114 = vld [vmem:[#allocation3 + $0x71] sm:$0xff]
        %v1115 = vld [vmem:[#allocation4 + $0x80] sm:$0xff]
        %v1116 = vld [vmem:[#allocation4 + $0x88] sm:$0xff]
        %v1117 = vld [vmem:[#allocation4 + $0x90] sm:$0xff]
        %v1118 = vld [vmem:[#allocation4 + $0x98] sm:$0xff]
        %v1119 = vld [vmem:[#allocation4 + $0xa0] sm:$0xff]
        %v1120 = vld [vmem:[#allocation4 + $0xa8] sm:$0xff]
        %v1121 = vld [vmem:[#allocation4 + $0xb0] sm:$0xff]
        %v1122 = vld [vmem:[#allocation4 + $0xb8] sm:$0xff]
        %v1123 = vld [vmem:[#allocation4 + $0xc0] sm:$0xff]
        %v1124 = vld [vmem:[#allocation4 + $0xc8] sm:$0xff]
        %v1125 = vld [vmem:[#allocation4 + $0xd0] sm:$0xff]
        %v1126 = vld [vmem:[#allocation4 + $0xd8] sm:$0xff]
        %v1127 = vld [vmem:[#allocation4 + $0xe0] sm:$0xff]
        %v1128 = vld [vmem:[#allocation4 + $0xe8] sm:$0xff]
        %v1129 = vld [vmem:[#allocation4 + $0xf0] sm:$0xff]
        %v1130 = vld [vmem:[#allocation4 + $0xf8] sm:$0xff]
        %1131 = vmatprep.subr.mxu0 0.0
        %1132 = vmatpush1.msra.mxu0 %v1115
        %1133 = vmatprep.subr.mxu0 0.0
        %1134 = vmatpush1.msra.mxu0 %v1116
        %1135 = vmatprep.subr.mxu0 0.0
        %1136 = vmatpush1.msra.mxu0 %v1117
        %1137 = vmatprep.subr.mxu0 0.0
        %1138 = vmatpush1.msra.mxu0 %v1118
        %1139 = vmatprep.subr.mxu0 0.0
        %1140 = vmatpush1.msra.mxu0 %v1119
        %1141 = vmatprep.subr.mxu0 0.0
        %1142 = vmatpush1.msra.mxu0 %v1120
        %1143 = vmatprep.subr.mxu0 0.0
        %1144 = vmatpush1.msra.mxu0 %v1121
        %1145 = vmatprep.subr.mxu0 0.0
        %1146 = vmatpush1.msra.mxu0 %v1122
        %1147 = vmatprep.subr.mxu0 0.0
        %1148 = vmatpush1.msra.mxu0 %v1123
        %1149 = vmatprep.subr.mxu0 0.0
        %1150 = vmatpush1.msra.mxu0 %v1124
        %1151 = vmatprep.subr.mxu0 0.0
        %1152 = vmatpush1.msra.mxu0 %v1125
        %1153 = vmatprep.subr.mxu0 0.0
        %1154 = vmatpush1.msra.mxu0 %v1126
        %1155 = vmatprep.subr.mxu0 0.0
        %1156 = vmatpush1.msra.mxu0 %v1127
        %1157 = vmatprep.subr.mxu0 0.0
        %1158 = vmatpush1.msra.mxu0 %v1128
        %1159 = vmatprep.subr.mxu0 0.0
        %1160 = vmatpush1.msra.mxu0 %v1129
        %1161 = vmatprep.subr.mxu0 0.0
        %1162 = vmatpush1.msra.mxu0 %v1130
        %1163 = vmatprep.subr.mxu0 0.0
        %1164 = vmatpush1.msra.mxu0 0.0
        %1165 = vmatprep.subr.mxu0 0.0
        %1166 = vmatpush1.msra.mxu0 0.0
        %1167 = vmatprep.subr.mxu0 0.0
        %1168 = vmatpush1.msra.mxu0 0.0
        %1169 = vmatprep.subr.mxu0 0.0
        %1170 = vmatpush1.msra.mxu0 0.0
        %1171 = vmatprep.subr.mxu0 0.0
        %1172 = vmatpush1.msra.mxu0 0.0
        %1173 = vmatprep.subr.mxu0 0.0
        %1174 = vmatpush1.msra.mxu0 0.0
        %1175 = vmatprep.subr.mxu0 0.0
        %1176 = vmatpush1.msra.mxu0 0.0
        %1177 = vmatprep.subr.mxu0 0.0
        %1178 = vmatpush1.msra.mxu0 0.0
        %1179 = vmatprep.subr.mxu0 0.0
        %1180 = vmatpush1.msra.mxu0 0.0
        %1181 = vmatprep.subr.mxu0 0.0
        %1182 = vmatpush1.msra.mxu0 0.0
        %1183 = vmatprep.subr.mxu0 0.0
        %1184 = vmatpush1.msra.mxu0 0.0
        %1185 = vmatprep.subr.mxu0 0.0
        %1186 = vmatpush1.msra.mxu0 0.0
        %1187 = vmatprep.subr.mxu0 0.0
        %1188 = vmatpush1.msra.mxu0 0.0
        %1189 = vmatprep.subr.mxu0 0.0
        %1190 = vmatpush1.msra.mxu0 0.0
        %1191 = vmatprep.subr.mxu0 0.0
        %1192 = vmatpush1.msra.mxu0 0.0
        %1193 = vmatprep.subr.mxu0 0.0
        %1194 = vmatpush1.msra.mxu0 0.0
        %1195 = vmatprep.mubr.f32.mxu0 0.0
        %1196 = vmatmul.mubr.f32.gmra.mrb[0].mxu0 %v1107
        %v1197 = vpop.f32.mrb[0].mxu0
        %v1198 = vadd.f32 0.0, %v1197
        %v1199 = vpop.f32.mrb[0].mxu0
        %1200 = vmatprep.mubr.f32.mxu0 0.0
        %1201 = vmatmul.mubr.f32.gmra.mrb[0].mxu0 %v1108
        %v1202 = vpop.f32.mrb[0].mxu0
        %v1203 = vadd.f32 0.0, %v1202
        %v1204 = vpop.f32.mrb[0].mxu0
        %1205 = vmatprep.mubr.f32.mxu0 0.0
        %1206 = vmatmul.mubr.f32.gmra.mrb[0].mxu0 %v1109
        %v1207 = vpop.f32.mrb[0].mxu0
        %v1208 = vadd.f32 0.0, %v1207
        %v1209 = vpop.f32.mrb[0].mxu0
        %1210 = vmatprep.mubr.f32.mxu0 0.0
        %1211 = vmatmul.mubr.f32.gmra.mrb[0].mxu0 %v1110
        %v1212 = vpop.f32.mrb[0].mxu0
        %v1213 = vadd.f32 0.0, %v1212
        %v1214 = vpop.f32.mrb[0].mxu0
        %1215 = vmatprep.mubr.f32.mxu0 0.0
        %1216 = vmatmul.mubr.f32.gmra.mrb[0].mxu0 %v1111
        %v1217 = vpop.f32.mrb[0].mxu0
        %v1218 = vadd.f32 0.0, %v1217
        %v1219 = vpop.f32.mrb[0].mxu0
        %1220 = vmatprep.mubr.f32.mxu0 0.0
        %1221 = vmatmul.mubr.f32.gmra.mrb[0].mxu0 %v1112
        %v1222 = vpop.f32.mrb[0].mxu0
        %v1223 = vadd.f32 0.0, %v1222
        %v1224 = vpop.f32.mrb[0].mxu0
        %1225 = vmatprep.mubr.f32.mxu0 0.0
        %1226 = vmatmul.mubr.f32.gmra.mrb[0].mxu0 %v1113
        %v1227 = vpop.f32.mrb[0].mxu0
        %v1228 = vadd.f32 0.0, %v1227
        %v1229 = vpop.f32.mrb[0].mxu0
        %1230 = vmatprep.mubr.f32.mxu0 0.0
        %1231 = vmatmul.mubr.f32.gmra.mrb[0].mxu0 %v1114
        %v1232 = vpop.f32.mrb[0].mxu0
        %v1233 = vadd.f32 0.0, %v1232
        %v1234 = vpop.f32.mrb[0].mxu0
        %1235 = vdwg.mxu0
        %1236 = vmatprep.subr.mxu0 0.0
        %1237 = vmatpush1.msra.mxu0 %v1091
        %1238 = vmatprep.subr.mxu0 0.0
        %1239 = vmatpush1.msra.mxu0 %v1092
        %1240 = vmatprep.subr.mxu0 0.0
        %1241 = vmatpush1.msra.mxu0 %v1093
        %1242 = vmatprep.subr.mxu0 0.0
        %1243 = vmatpush1.msra.mxu0 %v1094
        %1244 = vmatprep.subr.mxu0 0.0
        %1245 = vmatpush1.msra.mxu0 %v1095
        %1246 = vmatprep.subr.mxu0 0.0
        %1247 = vmatpush1.msra.mxu0 %v1096
        %1248 = vmatprep.subr.mxu0 0.0
        %1249 = vmatpush1.msra.mxu0 %v1097
        %1250 = vmatprep.subr.mxu0 0.0
        %1251 = vmatpush1.msra.mxu0 %v1098
        %1252 = vmatprep.subr.mxu0 0.0
        %1253 = vmatpush1.msra.mxu0 %v1099
        %1254 = vmatprep.subr.mxu0 0.0
        %1255 = vmatpush1.msra.mxu0 %v1100
        %1256 = vmatprep.subr.mxu0 0.0
        %1257 = vmatpush1.msra.mxu0 %v1101
        %1258 = vmatprep.subr.mxu0 0.0
        %1259 = vmatpush1.msra.mxu0 %v1102
        %1260 = vmatprep.subr.mxu0 0.0
        %1261 = vmatpush1.msra.mxu0 %v1103
        %1262 = vmatprep.subr.mxu0 0.0
        %1263 = vmatpush1.msra.mxu0 %v1104
        %1264 = vmatprep.subr.mxu0 0.0
        %1265 = vmatpush1.msra.mxu0 %v1105
        %1266 = vmatprep.subr.mxu0 0.0
        %1267 = vmatpush1.msra.mxu0 %v1106
        %1268 = vmatprep.subr.mxu0 0.0
        %1269 = vmatpush1.msra.mxu0 0.0
        %1270 = vmatprep.subr.mxu0 0.0
        %1271 = vmatpush1.msra.mxu0 0.0
        %1272 = vmatprep.subr.mxu0 0.0
        %1273 = vmatpush1.msra.mxu0 0.0
        %1274 = vmatprep.subr.mxu0 0.0
        %1275 = vmatpush1.msra.mxu0 0.0
        %1276 = vmatprep.subr.mxu0 0.0
        %1277 = vmatpush1.msra.mxu0 0.0
        %1278 = vmatprep.subr.mxu0 0.0
        %1279 = vmatpush1.msra.mxu0 0.0
        %1280 = vmatprep.subr.mxu0 0.0
        %1281 = vmatpush1.msra.mxu0 0.0
        %1282 = vmatprep.subr.mxu0 0.0
        %1283 = vmatpush1.msra.mxu0 0.0
        %1284 = vmatprep.subr.mxu0 0.0
        %1285 = vmatpush1.msra.mxu0 0.0
        %1286 = vmatprep.subr.mxu0 0.0
        %1287 = vmatpush1.msra.mxu0 0.0
        %1288 = vmatprep.subr.mxu0 0.0
        %1289 = vmatpush1.msra.mxu0 0.0
        %1290 = vmatprep.subr.mxu0 0.0
        %1291 = vmatpush1.msra.mxu0 0.0
        %1292 = vmatprep.subr.mxu0 0.0
        %1293 = vmatpush1.msra.mxu0 0.0
        %1294 = vmatprep.subr.mxu0 0.0
        %1295 = vmatpush1.msra.mxu0 0.0
        %1296 = vmatprep.subr.mxu0 0.0
        %1297 = vmatpush1.msra.mxu0 0.0
        %1298 = vmatprep.subr.mxu0 0.0
        %1299 = vmatpush1.msra.mxu0 0.0
        %1300 = vmatprep.mubr.f32.mxu0 0.0
        %1301 = vmatmul.mubr.f32.gmra.mrb[0].mxu0 %v1083
        %v1302 = vpop.f32.mrb[0].mxu0
        %v1303 = vadd.f32 %v1198, %v1302
        %v1304 = vpop.f32.mrb[0].mxu0
        %1305 = vmatprep.mubr.f32.mxu0 0.0
        %1306 = vmatmul.mubr.f32.gmra.mrb[0].mxu0 %v1084
        %v1307 = vpop.f32.mrb[0].mxu0
        %v1308 = vadd.f32 %v1203, %v1307
        %v1309 = vpop.f32.mrb[0].mxu0
        %1310 = vmatprep.mubr.f32.mxu0 0.0
        %1311 = vmatmul.mubr.f32.gmra.mrb[0].mxu0 %v1085
        %v1312 = vpop.f32.mrb[0].mxu0
        %v1313 = vadd.f32 %v1208, %v1312
        %v1314 = vpop.f32.mrb[0].mxu0
        %1315 = vmatprep.mubr.f32.mxu0 0.0
        %1316 = vmatmul.mubr.f32.gmra.mrb[0].mxu0 %v1086
        %v1317 = vpop.f32.mrb[0].mxu0
        %v1318 = vadd.f32 %v1213, %v1317
        %v1319 = vpop.f32.mrb[0].mxu0
        %1320 = vmatprep.mubr.f32.mxu0 0.0
        %1321 = vmatmul.mubr.f32.gmra.mrb[0].mxu0 %v1087
        %v1322 = vpop.f32.mrb[0].mxu0
        %v1323 = vadd.f32 %v1218, %v1322
        %v1324 = vpop.f32.mrb[0].mxu0
        %1325 = vmatprep.mubr.f32.mxu0 0.0
        %1326 = vmatmul.mubr.f32.gmra.mrb[0].mxu0 %v1088
        %v1327 = vpop.f32.mrb[0].mxu0
        %v1328 = vadd.f32 %v1223, %v1327
        %v1329 = vpop.f32.mrb[0].mxu0
        %1330 = vmatprep.mubr.f32.mxu0 0.0
        %1331 = vmatmul.mubr.f32.gmra.mrb[0].mxu0 %v1089
        %v1332 = vpop.f32.mrb[0].mxu0
        %v1333 = vadd.f32 %v1228, %v1332
        %v1334 = vpop.f32.mrb[0].mxu0
        %1335 = vmatprep.mubr.f32.mxu0 0.0
        %1336 = vmatmul.mubr.f32.gmra.mrb[0].mxu0 %v1090
        %v1337 = vpop.f32.mrb[0].mxu0
        %v1338 = vadd.f32 %v1233, %v1337
        %v1339 = vpop.f32.mrb[0].mxu0
        %1340 = vdwg.mxu0
        %v1341 = vld [vmem:[#allocation3 + $0x2] sm:$0xff]
        %v1342 = vld [vmem:[#allocation3 + $0x12] sm:$0xff]
        %v1343 = vld [vmem:[#allocation3 + $0x22] sm:$0xff]
        %v1344 = vld [vmem:[#allocation3 + $0x32] sm:$0xff]
        %v1345 = vld [vmem:[#allocation3 + $0x42] sm:$0xff]
        %v1346 = vld [vmem:[#allocation3 + $0x52] sm:$0xff]
        %v1347 = vld [vmem:[#allocation3 + $0x62] sm:$0xff]
        %v1348 = vld [vmem:[#allocation3 + $0x72] sm:$0xff]
        %v1349 = vld [vmem:[#allocation4 + $0x100] sm:$0xff]
        %v1350 = vld [vmem:[#allocation4 + $0x108] sm:$0xff]
        %v1351 = vld [vmem:[#allocation4 + $0x110] sm:$0xff]
        %v1352 = vld [vmem:[#allocation4 + $0x118] sm:$0xff]
        %v1353 = vld [vmem:[#allocation4 + $0x120] sm:$0xff]
        %v1354 = vld [vmem:[#allocation4 + $0x128] sm:$0xff]
        %v1355 = vld [vmem:[#allocation4 + $0x130] sm:$0xff]
        %v1356 = vld [vmem:[#allocation4 + $0x138] sm:$0xff]
        %v1357 = vld [vmem:[#allocation4 + $0x140] sm:$0xff]
        %v1358 = vld [vmem:[#allocation4 + $0x148] sm:$0xff]
        %v1359 = vld [vmem:[#allocation4 + $0x150] sm:$0xff]
        %v1360 = vld [vmem:[#allocation4 + $0x158] sm:$0xff]
        %v1361 = vld [vmem:[#allocation4 + $0x160] sm:$0xff]
        %v1362 = vld [vmem:[#allocation4 + $0x168] sm:$0xff]
        %v1363 = vld [vmem:[#allocation4 + $0x170] sm:$0xff]
        %v1364 = vld [vmem:[#allocation4 + $0x178] sm:$0xff]
        %1365 = vmatprep.subr.mxu0 0.0
        %1366 = vmatpush1.msra.mxu0 %v1349
        %1367 = vmatprep.subr.mxu0 0.0
        %1368 = vmatpush1.msra.mxu0 %v1350
        %1369 = vmatprep.subr.mxu0 0.0
        %1370 = vmatpush1.msra.mxu0 %v1351
        %1371 = vmatprep.subr.mxu0 0.0
        %1372 = vmatpush1.msra.mxu0 %v1352
        %1373 = vmatprep.subr.mxu0 0.0
        %1374 = vmatpush1.msra.mxu0 %v1353
        %1375 = vmatprep.subr.mxu0 0.0
        %1376 = vmatpush1.msra.mxu0 %v1354
        %1377 = vmatprep.subr.mxu0 0.0
        %1378 = vmatpush1.msra.mxu0 %v1355
        %1379 = vmatprep.subr.mxu0 0.0
        %1380 = vmatpush1.msra.mxu0 %v1356
        %1381 = vmatprep.subr.mxu0 0.0
        %1382 = vmatpush1.msra.mxu0 %v1357
        %1383 = vmatprep.subr.mxu0 0.0
        %1384 = vmatpush1.msra.mxu0 %v1358
        %1385 = vmatprep.subr.mxu0 0.0
        %1386 = vmatpush1.msra.mxu0 %v1359
        %1387 = vmatprep.subr.mxu0 0.0
        %1388 = vmatpush1.msra.mxu0 %v1360
        %1389 = vmatprep.subr.mxu0 0.0
        %1390 = vmatpush1.msra.mxu0 %v1361
        %1391 = vmatprep.subr.mxu0 0.0
        %1392 = vmatpush1.msra.mxu0 %v1362
        %1393 = vmatprep.subr.mxu0 0.0
        %1394 = vmatpush1.msra.mxu0 %v1363
        %1395 = vmatprep.subr.mxu0 0.0
        %1396 = vmatpush1.msra.mxu0 %v1364
        %1397 = vmatprep.subr.mxu0 0.0
        %1398 = vmatpush1.msra.mxu0 0.0
        %1399 = vmatprep.subr.mxu0 0.0
        %1400 = vmatpush1.msra.mxu0 0.0
        %1401 = vmatprep.subr.mxu0 0.0
        %1402 = vmatpush1.msra.mxu0 0.0
        %1403 = vmatprep.subr.mxu0 0.0
        %1404 = vmatpush1.msra.mxu0 0.0
        %1405 = vmatprep.subr.mxu0 0.0
        %1406 = vmatpush1.msra.mxu0 0.0
        %1407 = vmatprep.subr.mxu0 0.0
        %1408 = vmatpush1.msra.mxu0 0.0
        %1409 = vmatprep.subr.mxu0 0.0
        %1410 = vmatpush1.msra.mxu0 0.0
        %1411 = vmatprep.subr.mxu0 0.0
        %1412 = vmatpush1.msra.mxu0 0.0
        %1413 = vmatprep.subr.mxu0 0.0
        %1414 = vmatpush1.msra.mxu0 0.0
        %1415 = vmatprep.subr.mxu0 0.0
        %1416 = vmatpush1.msra.mxu0 0.0
        %1417 = vmatprep.subr.mxu0 0.0
        %1418 = vmatpush1.msra.mxu0 0.0
        %1419 = vmatprep.subr.mxu0 0.0
        %1420 = vmatpush1.msra.mxu0 0.0
        %1421 = vmatprep.subr.mxu0 0.0
        %1422 = vmatpush1.msra.mxu0 0.0
        %1423 = vmatprep.subr.mxu0 0.0
        %1424 = vmatpush1.msra.mxu0 0.0
        %1425 = vmatprep.subr.mxu0 0.0
        %1426 = vmatpush1.msra.mxu0 0.0
        %1427 = vmatprep.subr.mxu0 0.0
        %1428 = vmatpush1.msra.mxu0 0.0
        %1429 = vmatprep.mubr.f32.mxu0 0.0
        %1430 = vmatmul.mubr.f32.gmra.mrb[0].mxu0 %v1341
        %v1431 = vpop.f32.mrb[0].mxu0
        %v1432 = vadd.f32 0.0, %v1431
        %v1433 = vpop.f32.mrb[0].mxu0
        %1434 = vmatprep.mubr.f32.mxu0 0.0
        %1435 = vmatmul.mubr.f32.gmra.mrb[0].mxu0 %v1342
        %v1436 = vpop.f32.mrb[0].mxu0
        %v1437 = vadd.f32 0.0, %v1436
        %v1438 = vpop.f32.mrb[0].mxu0
        %1439 = vmatprep.mubr.f32.mxu0 0.0
        %1440 = vmatmul.mubr.f32.gmra.mrb[0].mxu0 %v1343
        %v1441 = vpop.f32.mrb[0].mxu0
        %v1442 = vadd.f32 0.0, %v1441
        %v1443 = vpop.f32.mrb[0].mxu0
        %1444 = vmatprep.mubr.f32.mxu0 0.0
        %1445 = vmatmul.mubr.f32.gmra.mrb[0].mxu0 %v1344
        %v1446 = vpop.f32.mrb[0].mxu0
        %v1447 = vadd.f32 0.0, %v1446
        %v1448 = vpop.f32.mrb[0].mxu0
        %1449 = vmatprep.mubr.f32.mxu0 0.0
        %1450 = vmatmul.mubr.f32.gmra.mrb[0].mxu0 %v1345
        %v1451 = vpop.f32.mrb[0].mxu0
        %v1452 = vadd.f32 0.0, %v1451
        %v1453 = vpop.f32.mrb[0].mxu0
        %1454 = vmatprep.mubr.f32.mxu0 0.0
        %1455 = vmatmul.mubr.f32.gmra.mrb[0].mxu0 %v1346
        %v1456 = vpop.f32.mrb[0].mxu0
        %v1457 = vadd.f32 0.0, %v1456
        %v1458 = vpop.f32.mrb[0].mxu0
        %1459 = vmatprep.mubr.f32.mxu0 0.0
        %1460 = vmatmul.mubr.f32.gmra.mrb[0].mxu0 %v1347
        %v1461 = vpop.f32.mrb[0].mxu0
        %v1462 = vadd.f32 0.0, %v1461
        %v1463 = vpop.f32.mrb[0].mxu0
        %1464 = vmatprep.mubr.f32.mxu0 0.0
        %1465 = vmatmul.mubr.f32.gmra.mrb[0].mxu0 %v1348
        %v1466 = vpop.f32.mrb[0].mxu0
        %v1467 = vadd.f32 0.0, %v1466
        %v1468 = vpop.f32.mrb[0].mxu0
        %1469 = vdwg.mxu0
        %v1470 = vadd.f32 %v1303, %v1432
        %v1471 = vadd.f32 %v1308, %v1437
        %v1472 = vadd.f32 %v1313, %v1442
        %v1473 = vadd.f32 %v1318, %v1447
        %v1474 = vadd.f32 %v1323, %v1452
        %v1475 = vadd.f32 %v1328, %v1457
        %v1476 = vadd.f32 %v1333, %v1462
        %v1477 = vadd.f32 %v1338, %v1467
        %v1478 = vld [vmem:[%s1061] sm:$0xff]
        %v1479 = vld [vmem:[%s1061 + $0x10] sm:$0xff]
        %v1480 = vld [vmem:[%s1061 + $0x20] sm:$0xff]
        %v1481 = vld [vmem:[%s1061 + $0x30] sm:$0xff]
        %v1482 = vld [vmem:[%s1061 + $0x40] sm:$0xff]
        %v1483 = vld [vmem:[%s1061 + $0x50] sm:$0xff]
        %v1484 = vld [vmem:[%s1061 + $0x60] sm:$0xff]
        %v1485 = vld [vmem:[%s1061 + $0x70] sm:$0xff]
        %v1486 = vld [vmem:[#allocation4 + $0x180] sm:$0xff]
        %v1487 = vld [vmem:[#allocation4 + $0x188] sm:$0xff]
        %v1488 = vld [vmem:[#allocation4 + $0x190] sm:$0xff]
        %v1489 = vld [vmem:[#allocation4 + $0x198] sm:$0xff]
        %v1490 = vld [vmem:[#allocation4 + $0x1a0] sm:$0xff]
        %v1491 = vld [vmem:[#allocation4 + $0x1a8] sm:$0xff]
        %v1492 = vld [vmem:[#allocation4 + $0x1b0] sm:$0xff]
        %v1493 = vld [vmem:[#allocation4 + $0x1b8] sm:$0xff]
        %v1494 = vld [vmem:[#allocation4 + $0x1c0] sm:$0xff]
        %v1495 = vld [vmem:[#allocation4 + $0x1c8] sm:$0xff]
        %v1496 = vld [vmem:[#allocation4 + $0x1d0] sm:$0xff]
        %v1497 = vld [vmem:[#allocation4 + $0x1d8] sm:$0xff]
        %v1498 = vld [vmem:[#allocation4 + $0x1e0] sm:$0xff]
        %v1499 = vld [vmem:[#allocation4 + $0x1e8] sm:$0xff]
        %v1500 = vld [vmem:[#allocation4 + $0x1f0] sm:$0xff]
        %v1501 = vld [vmem:[#allocation4 + $0x1f8] sm:$0xff]
        %1502 = vmatprep.subr.mxu0 0.0
        %1503 = vmatpush1.msra.mxu0 %v1486
        %1504 = vmatprep.subr.mxu0 0.0
        %1505 = vmatpush1.msra.mxu0 %v1487
        %1506 = vmatprep.subr.mxu0 0.0
        %1507 = vmatpush1.msra.mxu0 %v1488
        %1508 = vmatprep.subr.mxu0 0.0
        %1509 = vmatpush1.msra.mxu0 %v1489
        %1510 = vmatprep.subr.mxu0 0.0
        %1511 = vmatpush1.msra.mxu0 %v1490
        %1512 = vmatprep.subr.mxu0 0.0
        %1513 = vmatpush1.msra.mxu0 %v1491
        %1514 = vmatprep.subr.mxu0 0.0
        %1515 = vmatpush1.msra.mxu0 %v1492
        %1516 = vmatprep.subr.mxu0 0.0
        %1517 = vmatpush1.msra.mxu0 %v1493
        %1518 = vmatprep.subr.mxu0 0.0
        %1519 = vmatpush1.msra.mxu0 %v1494
        %1520 = vmatprep.subr.mxu0 0.0
        %1521 = vmatpush1.msra.mxu0 %v1495
        %1522 = vmatprep.subr.mxu0 0.0
        %1523 = vmatpush1.msra.mxu0 %v1496
        %1524 = vmatprep.subr.mxu0 0.0
        %1525 = vmatpush1.msra.mxu0 %v1497
        %1526 = vmatprep.subr.mxu0 0.0
        %1527 = vmatpush1.msra.mxu0 %v1498
        %1528 = vmatprep.subr.mxu0 0.0
        %1529 = vmatpush1.msra.mxu0 %v1499
        %1530 = vmatprep.subr.mxu0 0.0
        %1531 = vmatpush1.msra.mxu0 %v1500
        %1532 = vmatprep.subr.mxu0 0.0
        %1533 = vmatpush1.msra.mxu0 %v1501
        %1534 = vmatprep.subr.mxu0 0.0
        %1535 = vmatpush1.msra.mxu0 0.0
        %1536 = vmatprep.subr.mxu0 0.0
        %1537 = vmatpush1.msra.mxu0 0.0
        %1538 = vmatprep.subr.mxu0 0.0
        %1539 = vmatpush1.msra.mxu0 0.0
        %1540 = vmatprep.subr.mxu0 0.0
        %1541 = vmatpush1.msra.mxu0 0.0
        %1542 = vmatprep.subr.mxu0 0.0
        %1543 = vmatpush1.msra.mxu0 0.0
        %1544 = vmatprep.subr.mxu0 0.0
        %1545 = vmatpush1.msra.mxu0 0.0
        %1546 = vmatprep.subr.mxu0 0.0
        %1547 = vmatpush1.msra.mxu0 0.0
        %1548 = vmatprep.subr.mxu0 0.0
        %1549 = vmatpush1.msra.mxu0 0.0
        %1550 = vmatprep.subr.mxu0 0.0
        %1551 = vmatpush1.msra.mxu0 0.0
        %1552 = vmatprep.subr.mxu0 0.0
        %1553 = vmatpush1.msra.mxu0 0.0
        %1554 = vmatprep.subr.mxu0 0.0
        %1555 = vmatpush1.msra.mxu0 0.0
        %1556 = vmatprep.subr.mxu0 0.0
        %1557 = vmatpush1.msra.mxu0 0.0
        %1558 = vmatprep.subr.mxu0 0.0
        %1559 = vmatpush1.msra.mxu0 0.0
        %1560 = vmatprep.subr.mxu0 0.0
        %1561 = vmatpush1.msra.mxu0 0.0
        %1562 = vmatprep.subr.mxu0 0.0
        %1563 = vmatpush1.msra.mxu0 0.0
        %1564 = vmatprep.subr.mxu0 0.0
        %1565 = vmatpush1.msra.mxu0 0.0
        %1566 = vmatprep.mubr.f32.mxu0 0.0
        %1567 = vmatmul.mubr.f32.gmra.mrb[0].mxu0 %v1478
        %v1568 = vpop.f32.mrb[0].mxu0
        %v1569 = vadd.f32 0.0, %v1568
        %v1570 = vpop.f32.mrb[0].mxu0
        %1571 = vmatprep.mubr.f32.mxu0 0.0
        %1572 = vmatmul.mubr.f32.gmra.mrb[0].mxu0 %v1479
        %v1573 = vpop.f32.mrb[0].mxu0
        %v1574 = vadd.f32 0.0, %v1573
        %v1575 = vpop.f32.mrb[0].mxu0
        %1576 = vmatprep.mubr.f32.mxu0 0.0
        %1577 = vmatmul.mubr.f32.gmra.mrb[0].mxu0 %v1480
        %v1578 = vpop.f32.mrb[0].mxu0
        %v1579 = vadd.f32 0.0, %v1578
        %v1580 = vpop.f32.mrb[0].mxu0
        %1581 = vmatprep.mubr.f32.mxu0 0.0
        %1582 = vmatmul.mubr.f32.gmra.mrb[0].mxu0 %v1481
        %v1583 = vpop.f32.mrb[0].mxu0
        %v1584 = vadd.f32 0.0, %v1583
        %v1585 = vpop.f32.mrb[0].mxu0
        %1586 = vmatprep.mubr.f32.mxu0 0.0
        %1587 = vmatmul.mubr.f32.gmra.mrb[0].mxu0 %v1482
        %v1588 = vpop.f32.mrb[0].mxu0
        %v1589 = vadd.f32 0.0, %v1588
        %v1590 = vpop.f32.mrb[0].mxu0
        %1591 = vmatprep.mubr.f32.mxu0 0.0
        %1592 = vmatmul.mubr.f32.gmra.mrb[0].mxu0 %v1483
        %v1593 = vpop.f32.mrb[0].mxu0
        %v1594 = vadd.f32 0.0, %v1593
        %v1595 = vpop.f32.mrb[0].mxu0
        %1596 = vmatprep.mubr.f32.mxu0 0.0
        %1597 = vmatmul.mubr.f32.gmra.mrb[0].mxu0 %v1484
        %v1598 = vpop.f32.mrb[0].mxu0
        %v1599 = vadd.f32 0.0, %v1598
        %v1600 = vpop.f32.mrb[0].mxu0
        %1601 = vmatprep.mubr.f32.mxu0 0.0
        %1602 = vmatmul.mubr.f32.gmra.mrb[0].mxu0 %v1485
        %v1603 = vpop.f32.mrb[0].mxu0
        %v1604 = vadd.f32 0.0, %v1603
        %v1605 = vpop.f32.mrb[0].mxu0
        %1606 = vdwg.mxu0
        %v1607 = vadd.f32 %v1470, %v1569
        %v1608 = vadd.f32 %v1471, %v1574
        %v1609 = vadd.f32 %v1472, %v1579
        %v1610 = vadd.f32 %v1473, %v1584
        %v1611 = vadd.f32 %v1474, %v1589
        %v1612 = vadd.f32 %v1475, %v1594
        %v1613 = vadd.f32 %v1476, %v1599
        %v1614 = vadd.f32 %v1477, %v1604
        %v1615 = vld [vmem:[%s1061 + $0x1] sm:$0xff]
        %v1616 = vld [vmem:[%s1061 + $0x11] sm:$0xff]
        %v1617 = vld [vmem:[%s1061 + $0x21] sm:$0xff]
        %v1618 = vld [vmem:[%s1061 + $0x31] sm:$0xff]
        %v1619 = vld [vmem:[%s1061 + $0x41] sm:$0xff]
        %v1620 = vld [vmem:[%s1061 + $0x51] sm:$0xff]
        %v1621 = vld [vmem:[%s1061 + $0x61] sm:$0xff]
        %v1622 = vld [vmem:[%s1061 + $0x71] sm:$0xff]
        %v1623 = vld [vmem:[#allocation4 + $0x200] sm:$0xff]
        %v1624 = vld [vmem:[#allocation4 + $0x208] sm:$0xff]
        %v1625 = vld [vmem:[#allocation4 + $0x210] sm:$0xff]
        %v1626 = vld [vmem:[#allocation4 + $0x218] sm:$0xff]
        %v1627 = vld [vmem:[#allocation4 + $0x220] sm:$0xff]
        %v1628 = vld [vmem:[#allocation4 + $0x228] sm:$0xff]
        %v1629 = vld [vmem:[#allocation4 + $0x230] sm:$0xff]
        %v1630 = vld [vmem:[#allocation4 + $0x238] sm:$0xff]
        %v1631 = vld [vmem:[#allocation4 + $0x240] sm:$0xff]
        %v1632 = vld [vmem:[#allocation4 + $0x248] sm:$0xff]
        %v1633 = vld [vmem:[#allocation4 + $0x250] sm:$0xff]
        %v1634 = vld [vmem:[#allocation4 + $0x258] sm:$0xff]
        %v1635 = vld [vmem:[#allocation4 + $0x260] sm:$0xff]
        %v1636 = vld [vmem:[#allocation4 + $0x268] sm:$0xff]
        %v1637 = vld [vmem:[#allocation4 + $0x270] sm:$0xff]
        %v1638 = vld [vmem:[#allocation4 + $0x278] sm:$0xff]
        %1639 = vmatprep.subr.mxu0 0.0
        %1640 = vmatpush1.msra.mxu0 %v1623
        %1641 = vmatprep.subr.mxu0 0.0
        %1642 = vmatpush1.msra.mxu0 %v1624
        %1643 = vmatprep.subr.mxu0 0.0
        %1644 = vmatpush1.msra.mxu0 %v1625
        %1645 = vmatprep.subr.mxu0 0.0
        %1646 = vmatpush1.msra.mxu0 %v1626
        %1647 = vmatprep.subr.mxu0 0.0
        %1648 = vmatpush1.msra.mxu0 %v1627
        %1649 = vmatprep.subr.mxu0 0.0
        %1650 = vmatpush1.msra.mxu0 %v1628
        %1651 = vmatprep.subr.mxu0 0.0
        %1652 = vmatpush1.msra.mxu0 %v1629
        %1653 = vmatprep.subr.mxu0 0.0
        %1654 = vmatpush1.msra.mxu0 %v1630
        %1655 = vmatprep.subr.mxu0 0.0
        %1656 = vmatpush1.msra.mxu0 %v1631
        %1657 = vmatprep.subr.mxu0 0.0
        %1658 = vmatpush1.msra.mxu0 %v1632
        %1659 = vmatprep.subr.mxu0 0.0
        %1660 = vmatpush1.msra.mxu0 %v1633
        %1661 = vmatprep.subr.mxu0 0.0
        %1662 = vmatpush1.msra.mxu0 %v1634
        %1663 = vmatprep.subr.mxu0 0.0
        %1664 = vmatpush1.msra.mxu0 %v1635
        %1665 = vmatprep.subr.mxu0 0.0
        %1666 = vmatpush1.msra.mxu0 %v1636
        %1667 = vmatprep.subr.mxu0 0.0
        %1668 = vmatpush1.msra.mxu0 %v1637
        %1669 = vmatprep.subr.mxu0 0.0
        %1670 = vmatpush1.msra.mxu0 %v1638
        %1671 = vmatprep.subr.mxu0 0.0
        %1672 = vmatpush1.msra.mxu0 0.0
        %1673 = vmatprep.subr.mxu0 0.0
        %1674 = vmatpush1.msra.mxu0 0.0
        %1675 = vmatprep.subr.mxu0 0.0
        %1676 = vmatpush1.msra.mxu0 0.0
        %1677 = vmatprep.subr.mxu0 0.0
        %1678 = vmatpush1.msra.mxu0 0.0
        %1679 = vmatprep.subr.mxu0 0.0
        %1680 = vmatpush1.msra.mxu0 0.0
        %1681 = vmatprep.subr.mxu0 0.0
        %1682 = vmatpush1.msra.mxu0 0.0
        %1683 = vmatprep.subr.mxu0 0.0
        %1684 = vmatpush1.msra.mxu0 0.0
        %1685 = vmatprep.subr.mxu0 0.0
        %1686 = vmatpush1.msra.mxu0 0.0
        %1687 = vmatprep.subr.mxu0 0.0
        %1688 = vmatpush1.msra.mxu0 0.0
        %1689 = vmatprep.subr.mxu0 0.0
        %1690 = vmatpush1.msra.mxu0 0.0
        %1691 = vmatprep.subr.mxu0 0.0
        %1692 = vmatpush1.msra.mxu0 0.0
        %1693 = vmatprep.subr.mxu0 0.0
        %1694 = vmatpush1.msra.mxu0 0.0
        %1695 = vmatprep.subr.mxu0 0.0
        %1696 = vmatpush1.msra.mxu0 0.0
        %1697 = vmatprep.subr.mxu0 0.0
        %1698 = vmatpush1.msra.mxu0 0.0
        %1699 = vmatprep.subr.mxu0 0.0
        %1700 = vmatpush1.msra.mxu0 0.0
        %1701 = vmatprep.subr.mxu0 0.0
        %1702 = vmatpush1.msra.mxu0 0.0
        %1703 = vmatprep.mubr.f32.mxu0 0.0
        %1704 = vmatmul.mubr.f32.gmra.mrb[0].mxu0 %v1615
        %v1705 = vpop.f32.mrb[0].mxu0
        %v1706 = vadd.f32 0.0, %v1705
        %v1707 = vpop.f32.mrb[0].mxu0
        %1708 = vmatprep.mubr.f32.mxu0 0.0
        %1709 = vmatmul.mubr.f32.gmra.mrb[0].mxu0 %v1616
        %v1710 = vpop.f32.mrb[0].mxu0
        %v1711 = vadd.f32 0.0, %v1710
        %v1712 = vpop.f32.mrb[0].mxu0
        %1713 = vmatprep.mubr.f32.mxu0 0.0
        %1714 = vmatmul.mubr.f32.gmra.mrb[0].mxu0 %v1617
        %v1715 = vpop.f32.mrb[0].mxu0
        %v1716 = vadd.f32 0.0, %v1715
        %v1717 = vpop.f32.mrb[0].mxu0
        %1718 = vmatprep.mubr.f32.mxu0 0.0
        %1719 = vmatmul.mubr.f32.gmra.mrb[0].mxu0 %v1618
        %v1720 = vpop.f32.mrb[0].mxu0
        %v1721 = vadd.f32 0.0, %v1720
        %v1722 = vpop.f32.mrb[0].mxu0
        %1723 = vmatprep.mubr.f32.mxu0 0.0
        %1724 = vmatmul.mubr.f32.gmra.mrb[0].mxu0 %v1619
        %v1725 = vpop.f32.mrb[0].mxu0
        %v1726 = vadd.f32 0.0, %v1725
        %v1727 = vpop.f32.mrb[0].mxu0
        %1728 = vmatprep.mubr.f32.mxu0 0.0
        %1729 = vmatmul.mubr.f32.gmra.mrb[0].mxu0 %v1620
        %v1730 = vpop.f32.mrb[0].mxu0
        %v1731 = vadd.f32 0.0, %v1730
        %v1732 = vpop.f32.mrb[0].mxu0
        %1733 = vmatprep.mubr.f32.mxu0 0.0
        %1734 = vmatmul.mubr.f32.gmra.mrb[0].mxu0 %v1621
        %v1735 = vpop.f32.mrb[0].mxu0
        %v1736 = vadd.f32 0.0, %v1735
        %v1737 = vpop.f32.mrb[0].mxu0
        %1738 = vmatprep.mubr.f32.mxu0 0.0
        %1739 = vmatmul.mubr.f32.gmra.mrb[0].mxu0 %v1622
        %v1740 = vpop.f32.mrb[0].mxu0
        %v1741 = vadd.f32 0.0, %v1740
        %v1742 = vpop.f32.mrb[0].mxu0
        %1743 = vdwg.mxu0
        %v1744 = vadd.f32 %v1607, %v1706
        %v1745 = vadd.f32 %v1608, %v1711
        %v1746 = vadd.f32 %v1609, %v1716
        %v1747 = vadd.f32 %v1610, %v1721
        %v1748 = vadd.f32 %v1611, %v1726
        %v1749 = vadd.f32 %v1612, %v1731
        %v1750 = vadd.f32 %v1613, %v1736
        %v1751 = vadd.f32 %v1614, %v1741
        %v1752 = vld [vmem:[%s1061 + $0x2] sm:$0xff]
        %v1753 = vld [vmem:[%s1061 + $0x12] sm:$0xff]
        %v1754 = vld [vmem:[%s1061 + $0x22] sm:$0xff]
        %v1755 = vld [vmem:[%s1061 + $0x32] sm:$0xff]
        %v1756 = vld [vmem:[%s1061 + $0x42] sm:$0xff]
        %v1757 = vld [vmem:[%s1061 + $0x52] sm:$0xff]
        %v1758 = vld [vmem:[%s1061 + $0x62] sm:$0xff]
        %v1759 = vld [vmem:[%s1061 + $0x72] sm:$0xff]
        %v1760 = vld [vmem:[#allocation4 + $0x280] sm:$0xff]
        %v1761 = vld [vmem:[#allocation4 + $0x288] sm:$0xff]
        %v1762 = vld [vmem:[#allocation4 + $0x290] sm:$0xff]
        %v1763 = vld [vmem:[#allocation4 + $0x298] sm:$0xff]
        %v1764 = vld [vmem:[#allocation4 + $0x2a0] sm:$0xff]
        %v1765 = vld [vmem:[#allocation4 + $0x2a8] sm:$0xff]
        %v1766 = vld [vmem:[#allocation4 + $0x2b0] sm:$0xff]
        %v1767 = vld [vmem:[#allocation4 + $0x2b8] sm:$0xff]
        %v1768 = vld [vmem:[#allocation4 + $0x2c0] sm:$0xff]
        %v1769 = vld [vmem:[#allocation4 + $0x2c8] sm:$0xff]
        %v1770 = vld [vmem:[#allocation4 + $0x2d0] sm:$0xff]
        %v1771 = vld [vmem:[#allocation4 + $0x2d8] sm:$0xff]
        %v1772 = vld [vmem:[#allocation4 + $0x2e0] sm:$0xff]
        %v1773 = vld [vmem:[#allocation4 + $0x2e8] sm:$0xff]
        %v1774 = vld [vmem:[#allocation4 + $0x2f0] sm:$0xff]
        %v1775 = vld [vmem:[#allocation4 + $0x2f8] sm:$0xff]
        %1776 = vmatprep.subr.mxu0 0.0
        %1777 = vmatpush1.msra.mxu0 %v1760
        %1778 = vmatprep.subr.mxu0 0.0
        %1779 = vmatpush1.msra.mxu0 %v1761
        %1780 = vmatprep.subr.mxu0 0.0
        %1781 = vmatpush1.msra.mxu0 %v1762
        %1782 = vmatprep.subr.mxu0 0.0
        %1783 = vmatpush1.msra.mxu0 %v1763
        %1784 = vmatprep.subr.mxu0 0.0
        %1785 = vmatpush1.msra.mxu0 %v1764
        %1786 = vmatprep.subr.mxu0 0.0
        %1787 = vmatpush1.msra.mxu0 %v1765
        %1788 = vmatprep.subr.mxu0 0.0
        %1789 = vmatpush1.msra.mxu0 %v1766
        %1790 = vmatprep.subr.mxu0 0.0
        %1791 = vmatpush1.msra.mxu0 %v1767
        %1792 = vmatprep.subr.mxu0 0.0
        %1793 = vmatpush1.msra.mxu0 %v1768
        %1794 = vmatprep.subr.mxu0 0.0
        %1795 = vmatpush1.msra.mxu0 %v1769
        %1796 = vmatprep.subr.mxu0 0.0
        %1797 = vmatpush1.msra.mxu0 %v1770
        %1798 = vmatprep.subr.mxu0 0.0
        %1799 = vmatpush1.msra.mxu0 %v1771
        %1800 = vmatprep.subr.mxu0 0.0
        %1801 = vmatpush1.msra.mxu0 %v1772
        %1802 = vmatprep.subr.mxu0 0.0
        %1803 = vmatpush1.msra.mxu0 %v1773
        %1804 = vmatprep.subr.mxu0 0.0
        %1805 = vmatpush1.msra.mxu0 %v1774
        %1806 = vmatprep.subr.mxu0 0.0
        %1807 = vmatpush1.msra.mxu0 %v1775
        %1808 = vmatprep.subr.mxu0 0.0
        %1809 = vmatpush1.msra.mxu0 0.0
        %1810 = vmatprep.subr.mxu0 0.0
        %1811 = vmatpush1.msra.mxu0 0.0
        %1812 = vmatprep.subr.mxu0 0.0
        %1813 = vmatpush1.msra.mxu0 0.0
        %1814 = vmatprep.subr.mxu0 0.0
        %1815 = vmatpush1.msra.mxu0 0.0
        %1816 = vmatprep.subr.mxu0 0.0
        %1817 = vmatpush1.msra.mxu0 0.0
        %1818 = vmatprep.subr.mxu0 0.0
        %1819 = vmatpush1.msra.mxu0 0.0
        %1820 = vmatprep.subr.mxu0 0.0
        %1821 = vmatpush1.msra.mxu0 0.0
        %1822 = vmatprep.subr.mxu0 0.0
        %1823 = vmatpush1.msra.mxu0 0.0
        %1824 = vmatprep.subr.mxu0 0.0
        %1825 = vmatpush1.msra.mxu0 0.0
        %1826 = vmatprep.subr.mxu0 0.0
        %1827 = vmatpush1.msra.mxu0 0.0
        %1828 = vmatprep.subr.mxu0 0.0
        %1829 = vmatpush1.msra.mxu0 0.0
        %1830 = vmatprep.subr.mxu0 0.0
        %1831 = vmatpush1.msra.mxu0 0.0
        %1832 = vmatprep.subr.mxu0 0.0
        %1833 = vmatpush1.msra.mxu0 0.0
        %1834 = vmatprep.subr.mxu0 0.0
        %1835 = vmatpush1.msra.mxu0 0.0
        %1836 = vmatprep.subr.mxu0 0.0
        %1837 = vmatpush1.msra.mxu0 0.0
        %1838 = vmatprep.subr.mxu0 0.0
        %1839 = vmatpush1.msra.mxu0 0.0
        %1840 = vmatprep.mubr.f32.mxu0 0.0
        %1841 = vmatmul.mubr.f32.gmra.mrb[0].mxu0 %v1752
        %v1842 = vpop.f32.mrb[0].mxu0
        %v1843 = vadd.f32 0.0, %v1842
        %v1844 = vpop.f32.mrb[0].mxu0
        %1845 = vmatprep.mubr.f32.mxu0 0.0
        %1846 = vmatmul.mubr.f32.gmra.mrb[0].mxu0 %v1753
        %v1847 = vpop.f32.mrb[0].mxu0
        %v1848 = vadd.f32 0.0, %v1847
        %v1849 = vpop.f32.mrb[0].mxu0
        %1850 = vmatprep.mubr.f32.mxu0 0.0
        %1851 = vmatmul.mubr.f32.gmra.mrb[0].mxu0 %v1754
        %v1852 = vpop.f32.mrb[0].mxu0
        %v1853 = vadd.f32 0.0, %v1852
        %v1854 = vpop.f32.mrb[0].mxu0
        %1855 = vmatprep.mubr.f32.mxu0 0.0
        %1856 = vmatmul.mubr.f32.gmra.mrb[0].mxu0 %v1755
        %v1857 = vpop.f32.mrb[0].mxu0
        %v1858 = vadd.f32 0.0, %v1857
        %v1859 = vpop.f32.mrb[0].mxu0
        %1860 = vmatprep.mubr.f32.mxu0 0.0
        %1861 = vmatmul.mubr.f32.gmra.mrb[0].mxu0 %v1756
        %v1862 = vpop.f32.mrb[0].mxu0
        %v1863 = vadd.f32 0.0, %v1862
        %v1864 = vpop.f32.mrb[0].mxu0
        %1865 = vmatprep.mubr.f32.mxu0 0.0
        %1866 = vmatmul.mubr.f32.gmra.mrb[0].mxu0 %v1757
        %v1867 = vpop.f32.mrb[0].mxu0
        %v1868 = vadd.f32 0.0, %v1867
        %v1869 = vpop.f32.mrb[0].mxu0
        %1870 = vmatprep.mubr.f32.mxu0 0.0
        %1871 = vmatmul.mubr.f32.gmra.mrb[0].mxu0 %v1758
        %v1872 = vpop.f32.mrb[0].mxu0
        %v1873 = vadd.f32 0.0, %v1872
        %v1874 = vpop.f32.mrb[0].mxu0
        %1875 = vmatprep.mubr.f32.mxu0 0.0
        %1876 = vmatmul.mubr.f32.gmra.mrb[0].mxu0 %v1759
        %v1877 = vpop.f32.mrb[0].mxu0
        %v1878 = vadd.f32 0.0, %v1877
        %v1879 = vpop.f32.mrb[0].mxu0
        %1880 = vdwg.mxu0
        %v1881 = vadd.f32 %v1744, %v1843
        %v1882 = vadd.f32 %v1745, %v1848
        %v1883 = vadd.f32 %v1746, %v1853
        %v1884 = vadd.f32 %v1747, %v1858
        %v1885 = vadd.f32 %v1748, %v1863
        %v1886 = vadd.f32 %v1749, %v1868
        %v1887 = vadd.f32 %v1750, %v1873
        %v1888 = vadd.f32 %v1751, %v1878
        %s1889 = scalar_lea.vmem [#allocation3], 32
        %v1890 = vld [vmem:[%s1889] sm:$0xff]
        %v1891 = vld [vmem:[%s1889 + $0x10] sm:$0xff]
        %v1892 = vld [vmem:[%s1889 + $0x20] sm:$0xff]
        %v1893 = vld [vmem:[%s1889 + $0x30] sm:$0xff]
        %v1894 = vld [vmem:[%s1889 + $0x40] sm:$0xff]
        %v1895 = vld [vmem:[%s1889 + $0x50] sm:$0xff]
        %v1896 = vld [vmem:[%s1889 + $0x60] sm:$0xff]
        %v1897 = vld [vmem:[%s1889 + $0x70] sm:$0xff]
        %v1898 = vld [vmem:[#allocation4 + $0x300] sm:$0xff]
        %v1899 = vld [vmem:[#allocation4 + $0x308] sm:$0xff]
        %v1900 = vld [vmem:[#allocation4 + $0x310] sm:$0xff]
        %v1901 = vld [vmem:[#allocation4 + $0x318] sm:$0xff]
        %v1902 = vld [vmem:[#allocation4 + $0x320] sm:$0xff]
        %v1903 = vld [vmem:[#allocation4 + $0x328] sm:$0xff]
        %v1904 = vld [vmem:[#allocation4 + $0x330] sm:$0xff]
        %v1905 = vld [vmem:[#allocation4 + $0x338] sm:$0xff]
        %v1906 = vld [vmem:[#allocation4 + $0x340] sm:$0xff]
        %v1907 = vld [vmem:[#allocation4 + $0x348] sm:$0xff]
        %v1908 = vld [vmem:[#allocation4 + $0x350] sm:$0xff]
        %v1909 = vld [vmem:[#allocation4 + $0x358] sm:$0xff]
        %v1910 = vld [vmem:[#allocation4 + $0x360] sm:$0xff]
        %v1911 = vld [vmem:[#allocation4 + $0x368] sm:$0xff]
        %v1912 = vld [vmem:[#allocation4 + $0x370] sm:$0xff]
        %v1913 = vld [vmem:[#allocation4 + $0x378] sm:$0xff]
        %1914 = vmatprep.subr.mxu0 0.0
        %1915 = vmatpush1.msra.mxu0 %v1898
        %1916 = vmatprep.subr.mxu0 0.0
        %1917 = vmatpush1.msra.mxu0 %v1899
        %1918 = vmatprep.subr.mxu0 0.0
        %1919 = vmatpush1.msra.mxu0 %v1900
        %1920 = vmatprep.subr.mxu0 0.0
        %1921 = vmatpush1.msra.mxu0 %v1901
        %1922 = vmatprep.subr.mxu0 0.0
        %1923 = vmatpush1.msra.mxu0 %v1902
        %1924 = vmatprep.subr.mxu0 0.0
        %1925 = vmatpush1.msra.mxu0 %v1903
        %1926 = vmatprep.subr.mxu0 0.0
        %1927 = vmatpush1.msra.mxu0 %v1904
        %1928 = vmatprep.subr.mxu0 0.0
        %1929 = vmatpush1.msra.mxu0 %v1905
        %1930 = vmatprep.subr.mxu0 0.0
        %1931 = vmatpush1.msra.mxu0 %v1906
        %1932 = vmatprep.subr.mxu0 0.0
        %1933 = vmatpush1.msra.mxu0 %v1907
        %1934 = vmatprep.subr.mxu0 0.0
        %1935 = vmatpush1.msra.mxu0 %v1908
        %1936 = vmatprep.subr.mxu0 0.0
        %1937 = vmatpush1.msra.mxu0 %v1909
        %1938 = vmatprep.subr.mxu0 0.0
        %1939 = vmatpush1.msra.mxu0 %v1910
        %1940 = vmatprep.subr.mxu0 0.0
        %1941 = vmatpush1.msra.mxu0 %v1911
        %1942 = vmatprep.subr.mxu0 0.0
        %1943 = vmatpush1.msra.mxu0 %v1912
        %1944 = vmatprep.subr.mxu0 0.0
        %1945 = vmatpush1.msra.mxu0 %v1913
        %1946 = vmatprep.subr.mxu0 0.0
        %1947 = vmatpush1.msra.mxu0 0.0
        %1948 = vmatprep.subr.mxu0 0.0
        %1949 = vmatpush1.msra.mxu0 0.0
        %1950 = vmatprep.subr.mxu0 0.0
        %1951 = vmatpush1.msra.mxu0 0.0
        %1952 = vmatprep.subr.mxu0 0.0
        %1953 = vmatpush1.msra.mxu0 0.0
        %1954 = vmatprep.subr.mxu0 0.0
        %1955 = vmatpush1.msra.mxu0 0.0
        %1956 = vmatprep.subr.mxu0 0.0
        %1957 = vmatpush1.msra.mxu0 0.0
        %1958 = vmatprep.subr.mxu0 0.0
        %1959 = vmatpush1.msra.mxu0 0.0
        %1960 = vmatprep.subr.mxu0 0.0
        %1961 = vmatpush1.msra.mxu0 0.0
        %1962 = vmatprep.subr.mxu0 0.0
        %1963 = vmatpush1.msra.mxu0 0.0
        %1964 = vmatprep.subr.mxu0 0.0
        %1965 = vmatpush1.msra.mxu0 0.0
        %1966 = vmatprep.subr.mxu0 0.0
        %1967 = vmatpush1.msra.mxu0 0.0
        %1968 = vmatprep.subr.mxu0 0.0
        %1969 = vmatpush1.msra.mxu0 0.0
        %1970 = vmatprep.subr.mxu0 0.0
        %1971 = vmatpush1.msra.mxu0 0.0
        %1972 = vmatprep.subr.mxu0 0.0
        %1973 = vmatpush1.msra.mxu0 0.0
        %1974 = vmatprep.subr.mxu0 0.0
        %1975 = vmatpush1.msra.mxu0 0.0
        %1976 = vmatprep.subr.mxu0 0.0
        %1977 = vmatpush1.msra.mxu0 0.0
        %1978 = vmatprep.mubr.f32.mxu0 0.0
        %1979 = vmatmul.mubr.f32.gmra.mrb[0].mxu0 %v1890
        %v1980 = vpop.f32.mrb[0].mxu0
        %v1981 = vadd.f32 0.0, %v1980
        %v1982 = vpop.f32.mrb[0].mxu0
        %1983 = vmatprep.mubr.f32.mxu0 0.0
        %1984 = vmatmul.mubr.f32.gmra.mrb[0].mxu0 %v1891
        %v1985 = vpop.f32.mrb[0].mxu0
        %v1986 = vadd.f32 0.0, %v1985
        %v1987 = vpop.f32.mrb[0].mxu0
        %1988 = vmatprep.mubr.f32.mxu0 0.0
        %1989 = vmatmul.mubr.f32.gmra.mrb[0].mxu0 %v1892
        %v1990 = vpop.f32.mrb[0].mxu0
        %v1991 = vadd.f32 0.0, %v1990
        %v1992 = vpop.f32.mrb[0].mxu0
        %1993 = vmatprep.mubr.f32.mxu0 0.0
        %1994 = vmatmul.mubr.f32.gmra.mrb[0].mxu0 %v1893
        %v1995 = vpop.f32.mrb[0].mxu0
        %v1996 = vadd.f32 0.0, %v1995
        %v1997 = vpop.f32.mrb[0].mxu0
        %1998 = vmatprep.mubr.f32.mxu0 0.0
        %1999 = vmatmul.mubr.f32.gmra.mrb[0].mxu0 %v1894
        %v2000 = vpop.f32.mrb[0].mxu0
        %v2001 = vadd.f32 0.0, %v2000
        %v2002 = vpop.f32.mrb[0].mxu0
        %2003 = vmatprep.mubr.f32.mxu0 0.0
        %2004 = vmatmul.mubr.f32.gmra.mrb[0].mxu0 %v1895
        %v2005 = vpop.f32.mrb[0].mxu0
        %v2006 = vadd.f32 0.0, %v2005
        %v2007 = vpop.f32.mrb[0].mxu0
        %2008 = vmatprep.mubr.f32.mxu0 0.0
        %2009 = vmatmul.mubr.f32.gmra.mrb[0].mxu0 %v1896
        %v2010 = vpop.f32.mrb[0].mxu0
        %v2011 = vadd.f32 0.0, %v2010
        %v2012 = vpop.f32.mrb[0].mxu0
        %2013 = vmatprep.mubr.f32.mxu0 0.0
        %2014 = vmatmul.mubr.f32.gmra.mrb[0].mxu0 %v1897
        %v2015 = vpop.f32.mrb[0].mxu0
        %v2016 = vadd.f32 0.0, %v2015
        %v2017 = vpop.f32.mrb[0].mxu0
        %2018 = vdwg.mxu0
        %v2019 = vadd.f32 %v1881, %v1981
        %v2020 = vadd.f32 %v1882, %v1986
        %v2021 = vadd.f32 %v1883, %v1991
        %v2022 = vadd.f32 %v1884, %v1996
        %v2023 = vadd.f32 %v1885, %v2001
        %v2024 = vadd.f32 %v1886, %v2006
        %v2025 = vadd.f32 %v1887, %v2011
        %v2026 = vadd.f32 %v1888, %v2016
        %v2027 = vld [vmem:[%s1889 + $0x1] sm:$0xff]
        %v2028 = vld [vmem:[%s1889 + $0x11] sm:$0xff]
        %v2029 = vld [vmem:[%s1889 + $0x21] sm:$0xff]
        %v2030 = vld [vmem:[%s1889 + $0x31] sm:$0xff]
        %v2031 = vld [vmem:[%s1889 + $0x41] sm:$0xff]
        %v2032 = vld [vmem:[%s1889 + $0x51] sm:$0xff]
        %v2033 = vld [vmem:[%s1889 + $0x61] sm:$0xff]
        %v2034 = vld [vmem:[%s1889 + $0x71] sm:$0xff]
        %v2035 = vld [vmem:[#allocation4 + $0x380] sm:$0xff]
        %v2036 = vld [vmem:[#allocation4 + $0x388] sm:$0xff]
        %v2037 = vld [vmem:[#allocation4 + $0x390] sm:$0xff]
        %v2038 = vld [vmem:[#allocation4 + $0x398] sm:$0xff]
        %v2039 = vld [vmem:[#allocation4 + $0x3a0] sm:$0xff]
        %v2040 = vld [vmem:[#allocation4 + $0x3a8] sm:$0xff]
        %v2041 = vld [vmem:[#allocation4 + $0x3b0] sm:$0xff]
        %v2042 = vld [vmem:[#allocation4 + $0x3b8] sm:$0xff]
        %v2043 = vld [vmem:[#allocation4 + $0x3c0] sm:$0xff]
        %v2044 = vld [vmem:[#allocation4 + $0x3c8] sm:$0xff]
        %v2045 = vld [vmem:[#allocation4 + $0x3d0] sm:$0xff]
        %v2046 = vld [vmem:[#allocation4 + $0x3d8] sm:$0xff]
        %v2047 = vld [vmem:[#allocation4 + $0x3e0] sm:$0xff]
        %v2048 = vld [vmem:[#allocation4 + $0x3e8] sm:$0xff]
        %v2049 = vld [vmem:[#allocation4 + $0x3f0] sm:$0xff]
        %v2050 = vld [vmem:[#allocation4 + $0x3f8] sm:$0xff]
        %2051 = vmatprep.subr.mxu0 0.0
        %2052 = vmatpush1.msra.mxu0 %v2035
        %2053 = vmatprep.subr.mxu0 0.0
        %2054 = vmatpush1.msra.mxu0 %v2036
        %2055 = vmatprep.subr.mxu0 0.0
        %2056 = vmatpush1.msra.mxu0 %v2037
        %2057 = vmatprep.subr.mxu0 0.0
        %2058 = vmatpush1.msra.mxu0 %v2038
        %2059 = vmatprep.subr.mxu0 0.0
        %2060 = vmatpush1.msra.mxu0 %v2039
        %2061 = vmatprep.subr.mxu0 0.0
        %2062 = vmatpush1.msra.mxu0 %v2040
        %2063 = vmatprep.subr.mxu0 0.0
        %2064 = vmatpush1.msra.mxu0 %v2041
        %2065 = vmatprep.subr.mxu0 0.0
        %2066 = vmatpush1.msra.mxu0 %v2042
        %2067 = vmatprep.subr.mxu0 0.0
        %2068 = vmatpush1.msra.mxu0 %v2043
        %2069 = vmatprep.subr.mxu0 0.0
        %2070 = vmatpush1.msra.mxu0 %v2044
        %2071 = vmatprep.subr.mxu0 0.0
        %2072 = vmatpush1.msra.mxu0 %v2045
        %2073 = vmatprep.subr.mxu0 0.0
        %2074 = vmatpush1.msra.mxu0 %v2046
        %2075 = vmatprep.subr.mxu0 0.0
        %2076 = vmatpush1.msra.mxu0 %v2047
        %2077 = vmatprep.subr.mxu0 0.0
        %2078 = vmatpush1.msra.mxu0 %v2048
        %2079 = vmatprep.subr.mxu0 0.0
        %2080 = vmatpush1.msra.mxu0 %v2049
        %2081 = vmatprep.subr.mxu0 0.0
        %2082 = vmatpush1.msra.mxu0 %v2050
        %2083 = vmatprep.subr.mxu0 0.0
        %2084 = vmatpush1.msra.mxu0 0.0
        %2085 = vmatprep.subr.mxu0 0.0
        %2086 = vmatpush1.msra.mxu0 0.0
        %2087 = vmatprep.subr.mxu0 0.0
        %2088 = vmatpush1.msra.mxu0 0.0
        %2089 = vmatprep.subr.mxu0 0.0
        %2090 = vmatpush1.msra.mxu0 0.0
        %2091 = vmatprep.subr.mxu0 0.0
        %2092 = vmatpush1.msra.mxu0 0.0
        %2093 = vmatprep.subr.mxu0 0.0
        %2094 = vmatpush1.msra.mxu0 0.0
        %2095 = vmatprep.subr.mxu0 0.0
        %2096 = vmatpush1.msra.mxu0 0.0
        %2097 = vmatprep.subr.mxu0 0.0
        %2098 = vmatpush1.msra.mxu0 0.0
        %2099 = vmatprep.subr.mxu0 0.0
        %2100 = vmatpush1.msra.mxu0 0.0
        %2101 = vmatprep.subr.mxu0 0.0
        %2102 = vmatpush1.msra.mxu0 0.0
        %2103 = vmatprep.subr.mxu0 0.0
        %2104 = vmatpush1.msra.mxu0 0.0
        %2105 = vmatprep.subr.mxu0 0.0
        %2106 = vmatpush1.msra.mxu0 0.0
        %2107 = vmatprep.subr.mxu0 0.0
        %2108 = vmatpush1.msra.mxu0 0.0
        %2109 = vmatprep.subr.mxu0 0.0
        %2110 = vmatpush1.msra.mxu0 0.0
        %2111 = vmatprep.subr.mxu0 0.0
        %2112 = vmatpush1.msra.mxu0 0.0
        %2113 = vmatprep.subr.mxu0 0.0
        %2114 = vmatpush1.msra.mxu0 0.0
        %2115 = vmatprep.mubr.f32.mxu0 0.0
        %2116 = vmatmul.mubr.f32.gmra.mrb[0].mxu0 %v2027
        %v2117 = vpop.f32.mrb[0].mxu0
        %v2118 = vadd.f32 0.0, %v2117
        %v2119 = vpop.f32.mrb[0].mxu0
        %2120 = vmatprep.mubr.f32.mxu0 0.0
        %2121 = vmatmul.mubr.f32.gmra.mrb[0].mxu0 %v2028
        %v2122 = vpop.f32.mrb[0].mxu0
        %v2123 = vadd.f32 0.0, %v2122
        %v2124 = vpop.f32.mrb[0].mxu0
        %2125 = vmatprep.mubr.f32.mxu0 0.0
        %2126 = vmatmul.mubr.f32.gmra.mrb[0].mxu0 %v2029
        %v2127 = vpop.f32.mrb[0].mxu0
        %v2128 = vadd.f32 0.0, %v2127
        %v2129 = vpop.f32.mrb[0].mxu0
        %2130 = vmatprep.mubr.f32.mxu0 0.0
        %2131 = vmatmul.mubr.f32.gmra.mrb[0].mxu0 %v2030
        %v2132 = vpop.f32.mrb[0].mxu0
        %v2133 = vadd.f32 0.0, %v2132
        %v2134 = vpop.f32.mrb[0].mxu0
        %2135 = vmatprep.mubr.f32.mxu0 0.0
        %2136 = vmatmul.mubr.f32.gmra.mrb[0].mxu0 %v2031
        %v2137 = vpop.f32.mrb[0].mxu0
        %v2138 = vadd.f32 0.0, %v2137
        %v2139 = vpop.f32.mrb[0].mxu0
        %2140 = vmatprep.mubr.f32.mxu0 0.0
        %2141 = vmatmul.mubr.f32.gmra.mrb[0].mxu0 %v2032
        %v2142 = vpop.f32.mrb[0].mxu0
        %v2143 = vadd.f32 0.0, %v2142
        %v2144 = vpop.f32.mrb[0].mxu0
        %2145 = vmatprep.mubr.f32.mxu0 0.0
        %2146 = vmatmul.mubr.f32.gmra.mrb[0].mxu0 %v2033
        %v2147 = vpop.f32.mrb[0].mxu0
        %v2148 = vadd.f32 0.0, %v2147
        %v2149 = vpop.f32.mrb[0].mxu0
        %2150 = vmatprep.mubr.f32.mxu0 0.0
        %2151 = vmatmul.mubr.f32.gmra.mrb[0].mxu0 %v2034
        %v2152 = vpop.f32.mrb[0].mxu0
        %v2153 = vadd.f32 0.0, %v2152
        %v2154 = vpop.f32.mrb[0].mxu0
        %2155 = vdwg.mxu0
        %v2156 = vadd.f32 %v2019, %v2118
        %v2157 = vadd.f32 %v2020, %v2123
        %v2158 = vadd.f32 %v2021, %v2128
        %v2159 = vadd.f32 %v2022, %v2133
        %v2160 = vadd.f32 %v2023, %v2138
        %v2161 = vadd.f32 %v2024, %v2143
        %v2162 = vadd.f32 %v2025, %v2148
        %v2163 = vadd.f32 %v2026, %v2153
        %v2164 = vld [vmem:[%s1889 + $0x2] sm:$0xff]
        %v2165 = vld [vmem:[%s1889 + $0x12] sm:$0xff]
        %v2166 = vld [vmem:[%s1889 + $0x22] sm:$0xff]
        %v2167 = vld [vmem:[%s1889 + $0x32] sm:$0xff]
        %v2168 = vld [vmem:[%s1889 + $0x42] sm:$0xff]
        %v2169 = vld [vmem:[%s1889 + $0x52] sm:$0xff]
        %v2170 = vld [vmem:[%s1889 + $0x62] sm:$0xff]
        %v2171 = vld [vmem:[%s1889 + $0x72] sm:$0xff]
        %v2172 = vld [vmem:[#allocation4 + $0x400] sm:$0xff]
        %v2173 = vld [vmem:[#allocation4 + $0x408] sm:$0xff]
        %v2174 = vld [vmem:[#allocation4 + $0x410] sm:$0xff]
        %v2175 = vld [vmem:[#allocation4 + $0x418] sm:$0xff]
        %v2176 = vld [vmem:[#allocation4 + $0x420] sm:$0xff]
        %v2177 = vld [vmem:[#allocation4 + $0x428] sm:$0xff]
        %v2178 = vld [vmem:[#allocation4 + $0x430] sm:$0xff]
        %v2179 = vld [vmem:[#allocation4 + $0x438] sm:$0xff]
        %v2180 = vld [vmem:[#allocation4 + $0x440] sm:$0xff]
        %v2181 = vld [vmem:[#allocation4 + $0x448] sm:$0xff]
        %v2182 = vld [vmem:[#allocation4 + $0x450] sm:$0xff]
        %v2183 = vld [vmem:[#allocation4 + $0x458] sm:$0xff]
        %v2184 = vld [vmem:[#allocation4 + $0x460] sm:$0xff]
        %v2185 = vld [vmem:[#allocation4 + $0x468] sm:$0xff]
        %v2186 = vld [vmem:[#allocation4 + $0x470] sm:$0xff]
        %v2187 = vld [vmem:[#allocation4 + $0x478] sm:$0xff]
        %2188 = vmatprep.subr.mxu0 0.0
        %2189 = vmatpush1.msra.mxu0 %v2172
        %2190 = vmatprep.subr.mxu0 0.0
        %2191 = vmatpush1.msra.mxu0 %v2173
        %2192 = vmatprep.subr.mxu0 0.0
        %2193 = vmatpush1.msra.mxu0 %v2174
        %2194 = vmatprep.subr.mxu0 0.0
        %2195 = vmatpush1.msra.mxu0 %v2175
        %2196 = vmatprep.subr.mxu0 0.0
        %2197 = vmatpush1.msra.mxu0 %v2176
        %2198 = vmatprep.subr.mxu0 0.0
        %2199 = vmatpush1.msra.mxu0 %v2177
        %2200 = vmatprep.subr.mxu0 0.0
        %2201 = vmatpush1.msra.mxu0 %v2178
        %2202 = vmatprep.subr.mxu0 0.0
        %2203 = vmatpush1.msra.mxu0 %v2179
        %2204 = vmatprep.subr.mxu0 0.0
        %2205 = vmatpush1.msra.mxu0 %v2180
        %2206 = vmatprep.subr.mxu0 0.0
        %2207 = vmatpush1.msra.mxu0 %v2181
        %2208 = vmatprep.subr.mxu0 0.0
        %2209 = vmatpush1.msra.mxu0 %v2182
        %2210 = vmatprep.subr.mxu0 0.0
        %2211 = vmatpush1.msra.mxu0 %v2183
        %2212 = vmatprep.subr.mxu0 0.0
        %2213 = vmatpush1.msra.mxu0 %v2184
        %2214 = vmatprep.subr.mxu0 0.0
        %2215 = vmatpush1.msra.mxu0 %v2185
        %2216 = vmatprep.subr.mxu0 0.0
        %2217 = vmatpush1.msra.mxu0 %v2186
        %2218 = vmatprep.subr.mxu0 0.0
        %2219 = vmatpush1.msra.mxu0 %v2187
        %2220 = vmatprep.subr.mxu0 0.0
        %2221 = vmatpush1.msra.mxu0 0.0
        %2222 = vmatprep.subr.mxu0 0.0
        %2223 = vmatpush1.msra.mxu0 0.0
        %2224 = vmatprep.subr.mxu0 0.0
        %2225 = vmatpush1.msra.mxu0 0.0
        %2226 = vmatprep.subr.mxu0 0.0
        %2227 = vmatpush1.msra.mxu0 0.0
        %2228 = vmatprep.subr.mxu0 0.0
        %2229 = vmatpush1.msra.mxu0 0.0
        %2230 = vmatprep.subr.mxu0 0.0
        %2231 = vmatpush1.msra.mxu0 0.0
        %2232 = vmatprep.subr.mxu0 0.0
        %2233 = vmatpush1.msra.mxu0 0.0
        %2234 = vmatprep.subr.mxu0 0.0
        %2235 = vmatpush1.msra.mxu0 0.0
        %2236 = vmatprep.subr.mxu0 0.0
        %2237 = vmatpush1.msra.mxu0 0.0
        %2238 = vmatprep.subr.mxu0 0.0
        %2239 = vmatpush1.msra.mxu0 0.0
        %2240 = vmatprep.subr.mxu0 0.0
        %2241 = vmatpush1.msra.mxu0 0.0
        %2242 = vmatprep.subr.mxu0 0.0
        %2243 = vmatpush1.msra.mxu0 0.0
        %2244 = vmatprep.subr.mxu0 0.0
        %2245 = vmatpush1.msra.mxu0 0.0
        %2246 = vmatprep.subr.mxu0 0.0
        %2247 = vmatpush1.msra.mxu0 0.0
        %2248 = vmatprep.subr.mxu0 0.0
        %2249 = vmatpush1.msra.mxu0 0.0
        %2250 = vmatprep.subr.mxu0 0.0
        %2251 = vmatpush1.msra.mxu0 0.0
        %2252 = vmatprep.mubr.f32.mxu0 0.0
        %2253 = vmatmul.mubr.f32.gmra.mrb[0].mxu0 %v2164
        %v2254 = vpop.f32.mrb[0].mxu0
        %v2255 = vadd.f32 0.0, %v2254
        %v2256 = vpop.f32.mrb[0].mxu0
        %2257 = vmatprep.mubr.f32.mxu0 0.0
        %2258 = vmatmul.mubr.f32.gmra.mrb[0].mxu0 %v2165
        %v2259 = vpop.f32.mrb[0].mxu0
        %v2260 = vadd.f32 0.0, %v2259
        %v2261 = vpop.f32.mrb[0].mxu0
        %2262 = vmatprep.mubr.f32.mxu0 0.0
        %2263 = vmatmul.mubr.f32.gmra.mrb[0].mxu0 %v2166
        %v2264 = vpop.f32.mrb[0].mxu0
        %v2265 = vadd.f32 0.0, %v2264
        %v2266 = vpop.f32.mrb[0].mxu0
        %2267 = vmatprep.mubr.f32.mxu0 0.0
        %2268 = vmatmul.mubr.f32.gmra.mrb[0].mxu0 %v2167
        %v2269 = vpop.f32.mrb[0].mxu0
        %v2270 = vadd.f32 0.0, %v2269
        %v2271 = vpop.f32.mrb[0].mxu0
        %2272 = vmatprep.mubr.f32.mxu0 0.0
        %2273 = vmatmul.mubr.f32.gmra.mrb[0].mxu0 %v2168
        %v2274 = vpop.f32.mrb[0].mxu0
        %v2275 = vadd.f32 0.0, %v2274
        %v2276 = vpop.f32.mrb[0].mxu0
        %2277 = vmatprep.mubr.f32.mxu0 0.0
        %2278 = vmatmul.mubr.f32.gmra.mrb[0].mxu0 %v2169
        %v2279 = vpop.f32.mrb[0].mxu0
        %v2280 = vadd.f32 0.0, %v2279
        %v2281 = vpop.f32.mrb[0].mxu0
        %2282 = vmatprep.mubr.f32.mxu0 0.0
        %2283 = vmatmul.mubr.f32.gmra.mrb[0].mxu0 %v2170
        %v2284 = vpop.f32.mrb[0].mxu0
        %v2285 = vadd.f32 0.0, %v2284
        %v2286 = vpop.f32.mrb[0].mxu0
        %2287 = vmatprep.mubr.f32.mxu0 0.0
        %2288 = vmatmul.mubr.f32.gmra.mrb[0].mxu0 %v2171
        %v2289 = vpop.f32.mrb[0].mxu0
        %v2290 = vadd.f32 0.0, %v2289
        %v2291 = vpop.f32.mrb[0].mxu0
        %2292 = vdwg.mxu0
        %v2293 = vadd.f32 %v2156, %v2255
        %v2294 = vadd.f32 %v2157, %v2260
        %v2295 = vadd.f32 %v2158, %v2265
        %v2296 = vadd.f32 %v2159, %v2270
        %v2297 = vadd.f32 %v2160, %v2275
        %v2298 = vadd.f32 %v2161, %v2280
        %v2299 = vadd.f32 %v2162, %v2285
        %v2300 = vadd.f32 %v2163, %v2290
        %v2301 = vld [vmem:[%s5] sm:$0x1]
        %v2303 = vlaneseq
        %v2304 = vshrl.u32 %v2303, 7
        %v2305 = vsub.s32 0, %v2304
        %v2306 = vrot.slane %v2301, %v2305
        %v2308 = vmul.f32 %v2293, %v2306
        %v2309 = vmul.f32 %v2294, %v2306
        %v2310 = vmul.f32 %v2295, %v2306
        %v2311 = vmul.f32 %v2296, %v2306
        %v2312 = vmul.f32 %v2297, %v2306
        %v2313 = vmul.f32 %v2298, %v2306
        %v2314 = vmul.f32 %v2299, %v2306
        %v2315 = vmul.f32 %v2300, %v2306
        %v2316 = vld [vmem:[%s6] sm:$0x1]
        %v2318 = vlaneseq
        %v2319 = vshrl.u32 %v2318, 7
        %v2320 = vsub.s32 0, %v2319
        %v2321 = vrot.slane %v2316, %v2320
        %v2323 = vadd.f32 %v2308, %v2321
        %v2324 = vadd.f32 %v2309, %v2321
        %v2325 = vadd.f32 %v2310, %v2321
        %v2326 = vadd.f32 %v2311, %v2321
        %v2327 = vadd.f32 %v2312, %v2321
        %v2328 = vadd.f32 %v2313, %v2321
        %v2329 = vadd.f32 %v2314, %v2321
        %v2330 = vadd.f32 %v2315, %v2321
        %v2331 = vmax.f32 %v2323, 0.0
        %v2332 = vmax.f32 %v2324, 0.0
        %v2333 = vmax.f32 %v2325, 0.0
        %v2334 = vmax.f32 %v2326, 0.0
        %v2335 = vmax.f32 %v2327, 0.0
        %v2336 = vmax.f32 %v2328, 0.0
        %v2337 = vmax.f32 %v2329, 0.0
        %v2338 = vmax.f32 %v2330, 0.0
        %2339 = vst [vmem:[%s286] sm:$0xff] %v2331
        %2340 = vst [vmem:[%s286 + $0x8] sm:$0xff] %v2332
        %2341 = vst [vmem:[%s286 + $0x10] sm:$0xff] %v2333
        %2342 = vst [vmem:[%s286 + $0x18] sm:$0xff] %v2334
        %2343 = vst [vmem:[%s286 + $0x20] sm:$0xff] %v2335
        %2344 = vst [vmem:[%s286 + $0x28] sm:$0xff] %v2336
        %2345 = vst [vmem:[%s286 + $0x30] sm:$0xff] %v2337
        %2346 = vst [vmem:[%s286 + $0x38] sm:$0xff] %v2338
        %s2347 = sand.u32 %s182, 1
        %s2348 = scalar_lea.sflag [#allocation6], %s2347
        %s2349 = sand.u32 %s182, 1
        %s2350 = smul.addr %s2349, 64
        %s2351 = scalar_lea.vmem [#allocation7], %s2350
        // Predicated region
        $region53: #{tpu_custom_call.1} parent=47 // pred_check
          %p2352 = pneg %p192
        $region54: #{tpu_custom_call.1} parent=47 // pred_check_branch
          %2354 = sbr.rel (%p2352) target = $region56
        $region55: #{tpu_custom_call.1} parent=47 // pred_region
          %s2356 = ssub.s32 1024, 1024
          %2357 = vsyncadd %s2348, %s2356
          %s2358 = smul.addr %s22, 8
          %s2359 = smul.addr %s2358, 128
          %s2360 = scalar_lea.hbm %s7, %s2359
          %s2361 = sshll.u32 %s2351, 4
          %s2362 = int_to_ptr.vmem [resolvable:$true] %s2361
          %2367 = dma.vmem_to_hbm [thread:$0]  %s2362, 1024, %s2360, %s2348, 128, 128, 8
        $region56: #{tpu_custom_call.1} parent=47 // pred_fallthru
          _
      $region48: #{tpu_custom_call.1} parent=5 // pred_fallthru
        _
      %p2368 = scmp.le.s32.totalorder 2, %s17
      // Predicated region
      $region57: #{tpu_custom_call.1} parent=5 // pred_check
        %p2369 = pneg %p2368
      $region58: #{tpu_custom_call.1} parent=5 // pred_check_branch
        %2371 = sbr.rel (%p2369) target = $region60
      $region59: #{tpu_custom_call.1} parent=5 // pred_region
        %s2372 = ssub.s32 %s17, 2
        // Predicated region
        $region61: #{tpu_custom_call.1} parent=59 // pred_check
          %p2373 = pneg %p198
        $region62: #{tpu_custom_call.1} parent=59 // pred_check_branch
          %2375 = sbr.rel (%p2373) target = $region64
        $region63: #{tpu_custom_call.1} parent=59 // pred_region
          %s2376 = sand.u32 %s183, 1
          %s2377 = scalar_lea.sflag [#allocation6], %s2376
          %s2378 = sand.u32 %s183, 1
          %s2379 = smul.addr %s2378, 64
          %s2380 = scalar_lea.vmem [#allocation7], %s2379
          %2381 = dma.done %s2377, 1024
        $region64: #{tpu_custom_call.1} parent=59 // pred_fallthru
          _
      $region60: #{tpu_custom_call.1} parent=5 // pred_fallthru
        _
    $region6: #{tpu_custom_call.1} parent=1 // loop_footer
      %s21 = sadd.s32 1, %s17
    $region7: #{tpu_custom_call.1} parent=1 // loop_footer_branch
      %16 = sbr.rel target = $region3
    $region8: #{tpu_custom_call.1} parent=1 // loop_exit
      _
    %2382 = vsyncpa [#allocation5], 1
    %s2383 = scalar_lea.sflag [#allocation5], 1
    %2384 = vsyncpa %s2383, 1
    %2385 = vsyncpa [#allocation6], 1
    %s2386 = scalar_lea.sflag [#allocation6], 1
    %2387 = vsyncpa %s2386, 1

</llo_original>
